<compile_context>
chip_gen: v6e
topology: v6e:2x2x1
jax: 0.10.0
libtpu: 0.0.40
codegen_flags: <defaults>
</compile_context>

<pallas_src>
import functools
import math

import numpy as np
import jax
import jax.numpy as jnp
from jax import lax
from jax.experimental import pallas as pl
from jax.experimental.pallas import tpu as pltpu

_RATIO = 2
_FIR_K = 12


# ---------------------------------------------------------------------------
# Glue: kaiser-sinc FIR (identical to BigVGAN alias_free_torch filter)
# ---------------------------------------------------------------------------
def kaiser_sinc_filter1d(cutoff, half_width, kernel_size):
    even = kernel_size % 2 == 0
    half_size = kernel_size // 2
    delta_f = 4.0 * half_width
    A = 2.285 * (half_size - 1) * math.pi * delta_f + 7.95
    if A > 50.0:
        beta = 0.1102 * (A - 8.7)
    elif A >= 21.0:
        beta = 0.5842 * (A - 21.0) ** 0.4 + 0.07886 * (A - 21.0)
    else:
        beta = 0.0
    window = np.kaiser(kernel_size, beta)
    if even:
        time = np.arange(-half_size, half_size) + 0.5
    else:
        time = np.arange(kernel_size) - half_size
    filt = 2.0 * cutoff * window * np.sinc(2.0 * cutoff * time)
    filt = filt / filt.sum()
    return filt.astype(np.float32)


def _fir_taps():
    return tuple(float(v) for v in
                 kaiser_sinc_filter1d(0.5 / _RATIO, 0.6 / _RATIO, _FIR_K))


def build_up_down_operators(T, ratio=2, kernel_size=12):
    """Dense operators equivalent to alias_free UpSample1d / DownSample1d (reference only)."""
    f = kaiser_sinc_filter1d(0.5 / ratio, 0.6 / ratio, kernel_size)
    K, stride = kernel_size, ratio

    pad = K // ratio - 1
    pad_left = pad * stride + (K - stride) // 2
    pad_right = pad * stride + (K - stride + 1) // 2
    Tp = T + 2 * pad
    R1 = np.zeros((T, Tp), np.float32)
    for j in range(Tp):
        R1[min(max(j - pad, 0), T - 1), j] = 1.0
    Lct = (Tp - 1) * stride + K
    CT = np.zeros((Tp, Lct), np.float32)
    for j in range(Tp):
        for k in range(K):
            CT[j, stride * j + k] += f[k]
    U = ratio * (R1 @ CT)
    U = U[:, pad_left:Lct - pad_right]
    assert U.shape == (T, ratio * T)

    T2 = ratio * T
    dpl = K // 2 - 1
    dpr = K // 2
    T2p = T2 + dpl + dpr
    R2 = np.zeros((T2, T2p), np.float32)
    for j in range(T2p):
        R2[min(max(j - dpl, 0), T2 - 1), j] = 1.0
    Tout = (T2p - K) // stride + 1
    assert Tout == T
    Dm = np.zeros((T2p, Tout), np.float32)
    for t in range(Tout):
        for k in range(K):
            Dm[stride * t + k, t] += f[k]
    D = R2 @ Dm
    return jnp.asarray(U), jnp.asarray(D)


# ---------------------------------------------------------------------------
# Pallas kernel: both AMPBlock2 layers, fused, on one (C, L) halo'ed time window
# ---------------------------------------------------------------------------
def _amp_block2_kernel(fir, dilations, halo, t_true, t_tile, win_len, fuse_conv,
                       x_hbm, w_ref, b_ref, alpha_ref, invb_ref, o_ref,
                       win_ref, c0_ref, cT_ref, dma_sem):
    f = fir
    L = win_len
    b = pl.program_id(0)
    j = pl.program_id(1)
    is_boundary = jnp.logical_or(j == 0, j == pl.num_programs(1) - 1)

    # DMA the halo'ed (C, L) window for this tile straight from HBM (no materialized
    # overlapping-window array in the wrapper).
    start = pl.multiple_of(j * t_tile, 128)
    cp = pltpu.make_async_copy(x_hbm.at[b, :, pl.ds(start, L)], win_ref, dma_sem)
    cp.start()
    cp.wait()
    # TODO(synk): double-buffer this window DMA across grid steps if it shows up exposed.

    gstart = j * t_tile - halo                                  # global time of window col 0
    g = gstart + lax.broadcasted_iota(jnp.int32, (1, L), 1)     # global time index per column
    left = g < 0
    right = g >= t_true
    inb = jnp.logical_and(g >= 0, g < t_true)

    def shift_cols(v, k):
        # w[:, t] = v[:, t + k]; wrapped-around columns only ever land inside the
        # discarded halo margin (|k| <= 3 per stage, total <= halo), so no masking.
        if k == 0:
            return v
        return pltpu.roll(v, shift=(-k) % L, axis=1)

    def col_at(sig, pos):
        # column of `sig` at global time `pos` (masked lane reduction; boundary tiles only)
        return jnp.sum(jnp.where(g == pos, sig, 0.0), axis=1, keepdims=True)

    # polyphase tap tables: (shift, even-output-phase coeff, odd-output-phase coeff)
    up_taps = ((-3, f[11], None), (-2, f[9], f[10]), (-1, f[7], f[8]),
               (1, f[3], f[4]), (2, f[1], f[2]), (3, None, f[0]))
    dn_taps = ((-3, None, f[0]), (-2, f[1], f[2]), (-1, f[3], f[4]),
               (1, f[7], f[8]), (2, f[9], f[10]), (3, f[11], None))

    y = win_ref[...].astype(jnp.float32)                        # (C, L) residual stream

    for li, d in enumerate(dilations):                          # static unroll (2 layers)
        alpha = alpha_ref[li]                                   # (C, 1)  exp(log_alpha)
        invb = invb_ref[li]                                     # (C, 1)  1/(exp(log_beta)+eps)

        # replicate the residual stream beyond the true range [0, T).  Layer 0's window
        # was built with exact replicate padding in the wrapper, so it is already correct.
        if li == 0:
            s = y
        else:
            @pl.when(is_boundary)
            def _():
                c0_ref[...] = col_at(y, 0)
                cT_ref[...] = col_at(y, t_true - 1)
            s = jnp.where(left, c0_ref[...], jnp.where(right, cT_ref[...], y))

        # --- anti-aliased upsample x2: polyphase 12-tap FIR (XLU rolls + VPU FMAs) ---
        ue = (2.0 * f[5]) * s                                   # even output phase
        uo = (2.0 * f[6]) * s                                   # odd output phase
        for k, ce, co in up_taps:
            v = shift_cols(s, k)
            if ce is not None:
                ue = ue + (2.0 * ce) * v
            if co is not None:
                uo = uo + (2.0 * co) * v

        # --- SnakeBeta (log-scale params pre-exponentiated in glue) ---
        se = jnp.sin(ue * alpha)
        so = jnp.sin(uo * alpha)
        ue = ue + invb * se * se
        uo = uo + invb * so * so

        # --- anti-aliased downsample x2: replicate activated signal past [0, 2T), FIR ---
        @pl.when(is_boundary)
        def _():
            c0_ref[...] = col_at(ue, 0)          # activated sample 0
            cT_ref[...] = col_at(uo, t_true - 1)  # activated sample 2T-1
        e = jnp.where(left, c0_ref[...], jnp.where(right, cT_ref[...], ue))
        o = jnp.where(left, c0_ref[...], jnp.where(right, cT_ref[...], uo))
        xt = f[5] * e + f[6] * o
        for k, ce, co in dn_taps:
            if ce is not None:
                xt = xt + ce * shift_cols(e, k)
            if co is not None:
                xt = xt + co * shift_cols(o, k)

        # --- dilated Conv1d(C, C, k=3, pad=d): zero outside [0, T), bf16 MXU, f32 acc ---
        xtm = jnp.where(inb, xt, 0.0)
        if fuse_conv:
            # single (C, 3C) x (3C, L) matmul: rows [x[t-d]; x[t]; x[t+d]]
            rhs = jnp.concatenate(
                [shift_cols(xtm, -d), xtm, shift_cols(xtm, d)], axis=0
            ).astype(jnp.bfloat16)
            conv = jnp.dot(w_ref[li], rhs, preferred_element_type=jnp.float32)
        else:
            conv = jnp.dot(w_ref[li, 0], shift_cols(xtm, -d).astype(jnp.bfloat16),
                           preferred_element_type=jnp.float32)
            conv = conv + jnp.dot(w_ref[li, 1], xtm.astype(jnp.bfloat16),
                                  preferred_element_type=jnp.float32)
            conv = conv + jnp.dot(w_ref[li, 2], shift_cols(xtm, d).astype(jnp.bfloat16),
                                  preferred_element_type=jnp.float32)

        # --- residual ---
        y = conv + b_ref[li] + y

    o_ref[0] = y[:, halo:halo + t_tile].astype(o_ref.dtype)


def _choose_tile(T, halo, max_tile):
    """Time tile TT (multiple of 128 -> lane-dense output stores).  Requires
    T % TT == 0 or T % TT >= halo so replicate-boundary columns never influence an
    interior tile's output region."""
    cands = [tt for tt in (1024, 896, 768, 640, 512, 384, 256, 128) if tt <= max_tile]
    if T > 256:
        for tt in cands:
            if tt >= T:
                continue
            rem = T % tt
            if rem == 0 or rem >= halo:
                return tt
    if T <= max(cands):
        return max(128, -(-T // 128) * 128)          # single lane-dense tile
    raise ValueError(
        f"amp_block2_pallas: no valid time tile for T={T} (halo={halo}); pad T.")


def amp_block2_pallas(x, params, dilations=(1, 3), max_tile=None):
    """params: list of (W (C,C,3), b (C,), log_alpha (C,), log_beta (C,)) per layer
    (weight_norm folded; SnakeBeta with alpha_logscale=True)."""
    B, C, T = x.shape
    nl = len(params)
    assert nl == len(dilations)
    fir = _fir_taps()
    # per-side halo per layer: 3 (up FIR) + 3 (down FIR) + d (dilated conv)
    halo = sum(6 + int(d) for d in dilations)

    # chip-aware budgets (v5e/v6e: 128 MiB VMEM, v7x: 64 MiB)
    try:
        vmem_cap = int(pltpu.get_tpu_info().vmem_capacity_bytes)
    except Exception:
        vmem_cap = 64 * 1024 * 1024
    if max_tile is None:
        max_tile = 1024 if vmem_cap >= 100 * 1024 * 1024 else 640
    vmem_limit = int(max(32 * 1024 * 1024,
                         min(vmem_cap - 8 * 1024 * 1024, 100 * 1024 * 1024)))

    TT = _choose_tile(T, halo, max_tile)
    n_tiles = -(-T // TT)
    t_round = n_tiles * TT
    # lane-dense in-kernel window: round the halo'ed window length up to 128 lanes;
    # the extra columns hold valid replicate data and are discarded with the halo.
    L = -(-(TT + 2 * halo) // 128) * 128
    extra = L - (TT + 2 * halo)

    # replicate-pad once (O(T)); per-tile windows are DMA'd inside the kernel (no xwin)
    lpad = jnp.repeat(x[:, :, :1], halo, axis=2)
    rpad = jnp.repeat(x[:, :, -1:], (t_round - T) + halo + extra, axis=2)
    xpad = jnp.concatenate([lpad, x, rpad], axis=2)     # (B, C, t_round + 2*halo + extra)

    # parameter prep (glue): fold weight_norm, pre-exponentiate snake params, bf16 weights
    fuse_conv = (C % 8 == 0)
    if fuse_conv:
        w = jnp.stack([jnp.concatenate([W[:, :, 0], W[:, :, 1], W[:, :, 2]], axis=1)
                       for (W, _, _, _) in params]).astype(jnp.bfloat16)      # (nl, C, 3C)
        w_spec = pl.BlockSpec((nl, C, 3 * C), lambda b, j: (0, 0, 0))
    else:
        w = jnp.stack([jnp.transpose(W, (2, 0, 1)) for (W, _, _, _) in params]
                      ).astype(jnp.bfloat16)                                   # (nl, 3, C, C)
        w_spec = pl.BlockSpec((nl, 3, C, C), lambda b, j: (0, 0, 0, 0))
    bias = jnp.stack([bb.reshape(C, 1) for (_, bb, _, _) in params])           # (nl, C, 1)
    alpha = jnp.stack([jnp.exp(a).reshape(C, 1) for (_, _, a, _) in params])
    invb = jnp.stack([(1.0 / (jnp.exp(bt) + 1e-9)).reshape(C, 1) for (_, _, _, bt) in params])

    kernel = functools.partial(_amp_block2_kernel, fir,
                               tuple(int(d) for d in dilations),
                               halo, T, TT, L, fuse_conv)

    out = pl.pallas_call(
        kernel,
        out_shape=jax.ShapeDtypeStruct((B, C, t_round), x.dtype),
        grid=(B, n_tiles),
        in_specs=[
            pl.BlockSpec(memory_space=pl.ANY),                   # padded input stays in HBM
            w_spec,                                              # conv weights (bf16)
            pl.BlockSpec((nl, C, 1), lambda b, j: (0, 0, 0)),    # conv bias
            pl.BlockSpec((nl, C, 1), lambda b, j: (0, 0, 0)),    # snake alpha (pre-exp)
            pl.BlockSpec((nl, C, 1), lambda b, j: (0, 0, 0)),    # snake 1/(exp(beta)+eps)
        ],
        out_specs=pl.BlockSpec((1, C, TT), lambda b, j: (b, 0, j)),
        scratch_shapes=[
            pltpu.VMEM((C, L), jnp.float32),                     # halo'ed input window
            pltpu.VMEM((C, 1), jnp.float32),                     # left replicate column
            pltpu.VMEM((C, 1), jnp.float32),                     # right replicate column
            pltpu.SemaphoreType.DMA(()),
        ],
        compiler_params=pltpu.CompilerParams(
            dimension_semantics=("parallel", "parallel"),
            vmem_limit_bytes=vmem_limit),
    )(xpad, w, bias, alpha, invb)
    return out[:, :, :T]


# ---------------------------------------------------------------------------
# Pure-JAX reference (dense operators encode the exact PyTorch semantics)
# ---------------------------------------------------------------------------
def amp_block2_ref(x, params, uop, dop, dilations=(1, 3)):
    for (W, b, a, bt), d in zip(params, dilations):
        yup = jnp.einsum('bct,tu->bcu', x, uop)
        alpha = jnp.exp(a)[None, :, None]
        beta = jnp.exp(bt)[None, :, None]
        yact = yup + (1.0 / (beta + 1e-9)) * jnp.sin(yup * alpha) ** 2
        xt = jnp.einsum('bcu,ut->bct', yact, dop)
        conv = lax.conv_general_dilated(
            xt, W, window_strides=(1,), padding=[(d, d)], rhs_dilation=(d,),
            dimension_numbers=('NCH', 'OIH', 'NCH'))
        x = conv + b[None, :, None] + x
    return x


# ---------------------------------------------------------------------------
if __name__ == "__main__":
    B, C, T = 2, 8, 16            # C multiple of 8 exercises the fused conv matmul path
    DILATIONS = (1, 3)

    key = jax.random.PRNGKey(0)
    keys = jax.random.split(key, 9)
    x = jax.random.normal(keys[0], (B, C, T), jnp.float32)

    # Deterministic synthetic parameters (weight_norm ≡ identity reparam at init;
    # SnakeBeta with alpha_logscale=True, so alpha/beta are log-parameters).
    params = []
    for i in range(2):
        W = 0.01 * jax.random.normal(keys[1 + 4 * i], (C, C, 3), jnp.float32)
        b = 0.10 * jax.random.normal(keys[2 + 4 * i], (C,), jnp.float32)
        a = 0.50 * jax.random.normal(keys[3 + 4 * i], (C,), jnp.float32)
        bt = 0.50 * jax.random.normal(keys[4 + 4 * i], (C,), jnp.float32)
        params.append((W, b, a, bt))

    run = jax.jit(lambda xx: amp_block2_pallas(xx, params, DILATIONS))
    y = jax.block_until_ready(run(x))

    uop, dop = build_up_down_operators(T, ratio=_RATIO, kernel_size=_FIR_K)
    y_ref = amp_block2_ref(x, params, uop, dop, DILATIONS)

    assert y.shape == (B, C, T)
    err = float(jnp.max(jnp.abs(y - y_ref)))
    assert jnp.allclose(y, y_ref, rtol=1e-2, atol=1e-2), err
    print("KERNEL_OK")
</pallas_src>

<mosaic_0001>
module attributes {stable_mosaic.version = 11 : i64} {
  func.func @_amp_block2_kernel(%arg0: i32, %arg1: i32, %arg2: memref<2x8x256xf32, #tpu.memory_space<any>>, %arg3: memref<2x8x24xbf16, #tpu.memory_space<vmem>>, %arg4: memref<2x8x1xf32, #tpu.memory_space<vmem>>, %arg5: memref<2x8x1xf32, #tpu.memory_space<vmem>>, %arg6: memref<2x8x1xf32, #tpu.memory_space<vmem>>, %arg7: memref<1x8x128xf32, #tpu.memory_space<vmem>>, %arg8: memref<8x256xf32, #tpu.memory_space<vmem>>, %arg9: memref<8x1xf32, #tpu.memory_space<vmem>>, %arg10: memref<8x1xf32, #tpu.memory_space<vmem>>, %arg11: memref<!tpu.dma_semaphore, #tpu.memory_space<semaphore_mem>>) attributes {dimension_semantics = [#tpu.dimension_semantics<parallel>, #tpu.dimension_semantics<parallel>], iteration_bounds = array<i64: 2, 1>, scalar_prefetch = 0 : i64, scratch_operands = 4 : i64, tpu.core_type = #tpu.core_type<tc>, window_params = [{}, {pipeline_mode = #tpu.pipeline_mode<synchronous>, transform_indices = @transform_1, window_bounds = array<i64: 2, 8, 24>}, {pipeline_mode = #tpu.pipeline_mode<synchronous>, transform_indices = @transform_2, window_bounds = array<i64: 2, 8, 1>}, {pipeline_mode = #tpu.pipeline_mode<synchronous>, transform_indices = @transform_3, window_bounds = array<i64: 2, 8, 1>}, {pipeline_mode = #tpu.pipeline_mode<synchronous>, transform_indices = @transform_4, window_bounds = array<i64: 2, 8, 1>}, {transform_indices = @transform_5, window_bounds = array<i64: 1, 8, 128>}]} {
    %c0_i32 = arith.constant 0 : i32
    %0 = arith.cmpi eq, %arg1, %c0_i32 : i32
    %c0_i32_0 = arith.constant 0 : i32
    %1 = arith.cmpi eq, %arg1, %c0_i32_0 : i32
    %2 = arith.ori %0, %1 : i1
    %c128_i32 = arith.constant 128 : i32
    %3 = arith.muli %arg1, %c128_i32 : i32
    %4 = tpu.assume_multiple %3, 128 : i32
    %c0_i32_1 = arith.constant 0 : i32
    %5 = tpu.memref_slice %arg2[%arg0, %c0_i32_1, %4] : memref<2x8x256xf32, #tpu.memory_space<any>> -> memref<1x8x256xf32, #tpu.memory_space<any>>
    %6 = tpu.memref_squeeze %5 : memref<1x8x256xf32, #tpu.memory_space<any>> -> memref<8x256xf32, #tpu.memory_space<any>>
    tpu.enqueue_dma source(%6 : memref<8x256xf32, #tpu.memory_space<any>>) target(%arg8 : memref<8x256xf32, #tpu.memory_space<vmem>>) target_semaphore(%arg11 : memref<!tpu.dma_semaphore, #tpu.memory_space<semaphore_mem>>)
    %c0_i32_2 = arith.constant 0 : i32
    %7 = tpu.memref_slice %arg2[%arg0, %c0_i32_2, %4] : memref<2x8x256xf32, #tpu.memory_space<any>> -> memref<1x8x256xf32, #tpu.memory_space<any>>
    %8 = tpu.memref_squeeze %7 : memref<1x8x256xf32, #tpu.memory_space<any>> -> memref<8x256xf32, #tpu.memory_space<any>>
    tpu.wait_dma2 semaphore(%arg11 : memref<!tpu.dma_semaphore, #tpu.memory_space<semaphore_mem>>) src(%8 : memref<8x256xf32, #tpu.memory_space<any>>) dst(%arg8 : memref<8x256xf32, #tpu.memory_space<vmem>>)
    %c128_i32_3 = arith.constant 128 : i32
    %9 = arith.muli %arg1, %c128_i32_3 : i32
    %c16_i32 = arith.constant 16 : i32
    %10 = arith.subi %9, %c16_i32 : i32
    %11 = tpu.iota {dimensions = array<i32: 1>} : vector<1x256xi32>
    %12 = vector.broadcast %10 : i32 to vector<1x256xi32>
    %13 = arith.addi %12, %11 : vector<1x256xi32>
    %c0_i32_4 = arith.constant 0 : i32
    %14 = vector.broadcast %c0_i32_4 : i32 to vector<1x256xi32>
    %15 = arith.cmpi slt, %13, %14 : vector<1x256xi32>
    %c16_i32_5 = arith.constant 16 : i32
    %16 = vector.broadcast %c16_i32_5 : i32 to vector<1x256xi32>
    %17 = arith.cmpi sge, %13, %16 : vector<1x256xi32>
    %c0_i32_6 = arith.constant 0 : i32
    %18 = vector.broadcast %c0_i32_6 : i32 to vector<1x256xi32>
    %19 = arith.cmpi sge, %13, %18 : vector<1x256xi32>
    %c16_i32_7 = arith.constant 16 : i32
    %20 = vector.broadcast %c16_i32_7 : i32 to vector<1x256xi32>
    %21 = arith.cmpi slt, %13, %20 : vector<1x256xi32>
    %22 = arith.andi %19, %21 : vector<1x256xi1>
    %c0 = arith.constant 0 : index
    %c0_8 = arith.constant 0 : index
    %23 = vector.load %arg8[%c0, %c0_8] : memref<8x256xf32, #tpu.memory_space<vmem>>, vector<8x256xf32>
    %c0_9 = arith.constant 0 : index
    %c0_10 = arith.constant 0 : index
    %c0_11 = arith.constant 0 : index
    %24 = vector.load %arg5[%c0_9, %c0_10, %c0_11] : memref<2x8x1xf32, #tpu.memory_space<vmem>>, vector<1x8x1xf32>
    %25 = vector.shape_cast %24 : vector<1x8x1xf32> to vector<8x1xf32>
    %c0_12 = arith.constant 0 : index
    %c0_13 = arith.constant 0 : index
    %c0_14 = arith.constant 0 : index
    %26 = vector.load %arg6[%c0_12, %c0_13, %c0_14] : memref<2x8x1xf32, #tpu.memory_space<vmem>>, vector<1x8x1xf32>
    %27 = vector.shape_cast %26 : vector<1x8x1xf32> to vector<8x1xf32>
    %cst = arith.constant 0.886419594 : f32
    %28 = vector.broadcast %cst : f32 to vector<8x256xf32>
    %29 = arith.mulf %28, %23 : vector<8x256xf32>
    %cst_15 = arith.constant 0.886419594 : f32
    %30 = vector.broadcast %cst_15 : f32 to vector<8x256xf32>
    %31 = arith.mulf %30, %23 : vector<8x256xf32>
    %c3_i32 = arith.constant 3 : i32
    %32 = tpu.dynamic_rotate %23 by %c3_i32 dim 1 : vector<8x256xf32>, i32 -> vector<8x256xf32>
    %cst_16 = arith.constant 0.00405793311 : f32
    %33 = vector.broadcast %cst_16 : f32 to vector<8x256xf32>
    %34 = arith.mulf %33, %32 : vector<8x256xf32>
    %35 = arith.addf %29, %34 : vector<8x256xf32>
    %c2_i32 = arith.constant 2 : i32
    %36 = tpu.dynamic_rotate %23 by %c2_i32 dim 1 : vector<8x256xf32>, i32 -> vector<8x256xf32>
    %cst_17 = arith.constant -0.0510869287 : f32
    %37 = vector.broadcast %cst_17 : f32 to vector<8x256xf32>
    %38 = arith.mulf %37, %36 : vector<8x256xf32>
    %39 = arith.addf %35, %38 : vector<8x256xf32>
    %cst_18 = arith.constant 0.0187789276 : f32
    %40 = vector.broadcast %cst_18 : f32 to vector<8x256xf32>
    %41 = arith.mulf %40, %36 : vector<8x256xf32>
    %42 = arith.addf %31, %41 : vector<8x256xf32>
    %c1_i32 = arith.constant 1 : i32
    %43 = tpu.dynamic_rotate %23 by %c1_i32 dim 1 : vector<8x256xf32>, i32 -> vector<8x256xf32>
    %cst_19 = arith.constant 0.257145226 : f32
    %44 = vector.broadcast %cst_19 : f32 to vector<8x256xf32>
    %45 = arith.mulf %44, %43 : vector<8x256xf32>
    %46 = arith.addf %39, %45 : vector<8x256xf32>
    %cst_20 = arith.constant -0.115314752 : f32
    %47 = vector.broadcast %cst_20 : f32 to vector<8x256xf32>
    %48 = arith.mulf %47, %43 : vector<8x256xf32>
    %49 = arith.addf %42, %48 : vector<8x256xf32>
    %c255_i32 = arith.constant 255 : i32
    %50 = tpu.dynamic_rotate %23 by %c255_i32 dim 1 : vector<8x256xf32>, i32 -> vector<8x256xf32>
    %cst_21 = arith.constant -0.115314752 : f32
    %51 = vector.broadcast %cst_21 : f32 to vector<8x256xf32>
    %52 = arith.mulf %51, %50 : vector<8x256xf32>
    %53 = arith.addf %46, %52 : vector<8x256xf32>
    %cst_22 = arith.constant 0.257145226 : f32
    %54 = vector.broadcast %cst_22 : f32 to vector<8x256xf32>
    %55 = arith.mulf %54, %50 : vector<8x256xf32>
    %56 = arith.addf %49, %55 : vector<8x256xf32>
    %c254_i32 = arith.constant 254 : i32
    %57 = tpu.dynamic_rotate %23 by %c254_i32 dim 1 : vector<8x256xf32>, i32 -> vector<8x256xf32>
    %cst_23 = arith.constant 0.0187789276 : f32
    %58 = vector.broadcast %cst_23 : f32 to vector<8x256xf32>
    %59 = arith.mulf %58, %57 : vector<8x256xf32>
    %60 = arith.addf %53, %59 : vector<8x256xf32>
    %cst_24 = arith.constant -0.0510869287 : f32
    %61 = vector.broadcast %cst_24 : f32 to vector<8x256xf32>
    %62 = arith.mulf %61, %57 : vector<8x256xf32>
    %63 = arith.addf %56, %62 : vector<8x256xf32>
    %c253_i32 = arith.constant 253 : i32
    %64 = tpu.dynamic_rotate %23 by %c253_i32 dim 1 : vector<8x256xf32>, i32 -> vector<8x256xf32>
    %cst_25 = arith.constant 0.00405793311 : f32
    %65 = vector.broadcast %cst_25 : f32 to vector<8x256xf32>
    %66 = arith.mulf %65, %64 : vector<8x256xf32>
    %67 = arith.addf %63, %66 : vector<8x256xf32>
    %68 = vector.broadcast %25 : vector<8x1xf32> to vector<8x256xf32>
    %69 = arith.mulf %60, %68 : vector<8x256xf32>
    %70 = math.sin %69 : vector<8x256xf32>
    %71 = vector.broadcast %25 : vector<8x1xf32> to vector<8x256xf32>
    %72 = arith.mulf %67, %71 : vector<8x256xf32>
    %73 = math.sin %72 : vector<8x256xf32>
    %74 = vector.broadcast %27 : vector<8x1xf32> to vector<8x256xf32>
    %75 = arith.mulf %74, %70 : vector<8x256xf32>
    %76 = arith.mulf %75, %70 : vector<8x256xf32>
    %77 = arith.addf %60, %76 : vector<8x256xf32>
    %78 = vector.broadcast %27 : vector<8x1xf32> to vector<8x256xf32>
    %79 = arith.mulf %78, %73 : vector<8x256xf32>
    %80 = arith.mulf %79, %73 : vector<8x256xf32>
    %81 = arith.addf %67, %80 : vector<8x256xf32>
    %82 = arith.extui %2 : i1 to i32
    %c0_i32_26 = arith.constant 0 : i32
    %83 = arith.cmpi ne, %82, %c0_i32_26 : i32
    scf.if %83 {
      %c0_i32_139 = arith.constant 0 : i32
      %332 = vector.broadcast %c0_i32_139 : i32 to vector<1x256xi32>
      %333 = arith.cmpi eq, %13, %332 : vector<1x256xi32>
      %cst_140 = arith.constant 0.000000e+00 : f32
      %334 = vector.shape_cast %333 : vector<1x256xi1> to vector<1x256xi1>
      %335 = vector.broadcast %334 : vector<1x256xi1> to vector<8x256xi1>
      %336 = vector.broadcast %cst_140 : f32 to vector<8x256xf32>
      %337 = arith.select %335, %77, %336 : vector<8x256xi1>, vector<8x256xf32>
      %cst_141 = arith.constant dense<0.000000e+00> : vector<8xf32>
      %338 = vector.multi_reduction <add>, %337, %cst_141 [1] : vector<8x256xf32> to vector<8xf32>
      %339 = vector.shape_cast %338 : vector<8xf32> to vector<8x1xf32>
      %c0_142 = arith.constant 0 : index
      %c0_143 = arith.constant 0 : index
      %340 = vector.load %arg9[%c0_142, %c0_143] : memref<8x1xf32, #tpu.memory_space<vmem>>, vector<8x1xf32>
      tpu.vector_store %arg9[%c0_142, %c0_143], %339 {strides = array<i32>} : memref<8x1xf32, #tpu.memory_space<vmem>>, vector<8x1xf32>,
      %c15_i32 = arith.constant 15 : i32
      %341 = vector.broadcast %c15_i32 : i32 to vector<1x256xi32>
      %342 = arith.cmpi eq, %13, %341 : vector<1x256xi32>
      %cst_144 = arith.constant 0.000000e+00 : f32
      %343 = vector.shape_cast %342 : vector<1x256xi1> to vector<1x256xi1>
      %344 = vector.broadcast %343 : vector<1x256xi1> to vector<8x256xi1>
      %345 = vector.broadcast %cst_144 : f32 to vector<8x256xf32>
      %346 = arith.select %344, %81, %345 : vector<8x256xi1>, vector<8x256xf32>
      %cst_145 = arith.constant dense<0.000000e+00> : vector<8xf32>
      %347 = vector.multi_reduction <add>, %346, %cst_145 [1] : vector<8x256xf32> to vector<8xf32>
      %348 = vector.shape_cast %347 : vector<8xf32> to vector<8x1xf32>
      %c0_146 = arith.constant 0 : index
      %c0_147 = arith.constant 0 : index
      %349 = vector.load %arg10[%c0_146, %c0_147] : memref<8x1xf32, #tpu.memory_space<vmem>>, vector<8x1xf32>
      tpu.vector_store %arg10[%c0_146, %c0_147], %348 {strides = array<i32>} : memref<8x1xf32, #tpu.memory_space<vmem>>, vector<8x1xf32>,
    } else {
    }
    %c0_27 = arith.constant 0 : index
    %c0_28 = arith.constant 0 : index
    %84 = vector.load %arg9[%c0_27, %c0_28] : memref<8x1xf32, #tpu.memory_space<vmem>>, vector<8x1xf32>
    %c0_29 = arith.constant 0 : index
    %c0_30 = arith.constant 0 : index
    %85 = vector.load %arg10[%c0_29, %c0_30] : memref<8x1xf32, #tpu.memory_space<vmem>>, vector<8x1xf32>
    %86 = vector.shape_cast %17 : vector<1x256xi1> to vector<1x256xi1>
    %87 = vector.broadcast %86 : vector<1x256xi1> to vector<8x256xi1>
    %88 = vector.shape_cast %85 : vector<8x1xf32> to vector<8x1xf32>
    %89 = vector.broadcast %88 : vector<8x1xf32> to vector<8x256xf32>
    %90 = arith.select %87, %89, %77 : vector<8x256xi1>, vector<8x256xf32>
    %91 = vector.shape_cast %15 : vector<1x256xi1> to vector<1x256xi1>
    %92 = vector.broadcast %91 : vector<1x256xi1> to vector<8x256xi1>
    %93 = vector.shape_cast %84 : vector<8x1xf32> to vector<8x1xf32>
    %94 = vector.broadcast %93 : vector<8x1xf32> to vector<8x256xf32>
    %95 = arith.select %92, %94, %90 : vector<8x256xi1>, vector<8x256xf32>
    %c0_31 = arith.constant 0 : index
    %c0_32 = arith.constant 0 : index
    %96 = vector.load %arg9[%c0_31, %c0_32] : memref<8x1xf32, #tpu.memory_space<vmem>>, vector<8x1xf32>
    %c0_33 = arith.constant 0 : index
    %c0_34 = arith.constant 0 : index
    %97 = vector.load %arg10[%c0_33, %c0_34] : memref<8x1xf32, #tpu.memory_space<vmem>>, vector<8x1xf32>
    %98 = vector.shape_cast %17 : vector<1x256xi1> to vector<1x256xi1>
    %99 = vector.broadcast %98 : vector<1x256xi1> to vector<8x256xi1>
    %100 = vector.shape_cast %97 : vector<8x1xf32> to vector<8x1xf32>
    %101 = vector.broadcast %100 : vector<8x1xf32> to vector<8x256xf32>
    %102 = arith.select %99, %101, %81 : vector<8x256xi1>, vector<8x256xf32>
    %103 = vector.shape_cast %15 : vector<1x256xi1> to vector<1x256xi1>
    %104 = vector.broadcast %103 : vector<1x256xi1> to vector<8x256xi1>
    %105 = vector.shape_cast %96 : vector<8x1xf32> to vector<8x1xf32>
    %106 = vector.broadcast %105 : vector<8x1xf32> to vector<8x256xf32>
    %107 = arith.select %104, %106, %102 : vector<8x256xi1>, vector<8x256xf32>
    %cst_35 = arith.constant 0.443209797 : f32
    %108 = vector.broadcast %cst_35 : f32 to vector<8x256xf32>
    %109 = arith.mulf %108, %95 : vector<8x256xf32>
    %cst_36 = arith.constant 0.443209797 : f32
    %110 = vector.broadcast %cst_36 : f32 to vector<8x256xf32>
    %111 = arith.mulf %110, %107 : vector<8x256xf32>
    %112 = arith.addf %109, %111 : vector<8x256xf32>
    %c3_i32_37 = arith.constant 3 : i32
    %113 = tpu.dynamic_rotate %107 by %c3_i32_37 dim 1 : vector<8x256xf32>, i32 -> vector<8x256xf32>
    %cst_38 = arith.constant 0.00202896656 : f32
    %114 = vector.broadcast %cst_38 : f32 to vector<8x256xf32>
    %115 = arith.mulf %114, %113 : vector<8x256xf32>
    %116 = arith.addf %112, %115 : vector<8x256xf32>
    %c2_i32_39 = arith.constant 2 : i32
    %117 = tpu.dynamic_rotate %95 by %c2_i32_39 dim 1 : vector<8x256xf32>, i32 -> vector<8x256xf32>
    %cst_40 = arith.constant 0.00938946381 : f32
    %118 = vector.broadcast %cst_40 : f32 to vector<8x256xf32>
    %119 = arith.mulf %118, %117 : vector<8x256xf32>
    %120 = arith.addf %116, %119 : vector<8x256xf32>
    %c2_i32_41 = arith.constant 2 : i32
    %121 = tpu.dynamic_rotate %107 by %c2_i32_41 dim 1 : vector<8x256xf32>, i32 -> vector<8x256xf32>
    %cst_42 = arith.constant -0.0255434643 : f32
    %122 = vector.broadcast %cst_42 : f32 to vector<8x256xf32>
    %123 = arith.mulf %122, %121 : vector<8x256xf32>
    %124 = arith.addf %120, %123 : vector<8x256xf32>
    %c1_i32_43 = arith.constant 1 : i32
    %125 = tpu.dynamic_rotate %95 by %c1_i32_43 dim 1 : vector<8x256xf32>, i32 -> vector<8x256xf32>
    %cst_44 = arith.constant -0.0576573759 : f32
    %126 = vector.broadcast %cst_44 : f32 to vector<8x256xf32>
    %127 = arith.mulf %126, %125 : vector<8x256xf32>
    %128 = arith.addf %124, %127 : vector<8x256xf32>
    %c1_i32_45 = arith.constant 1 : i32
    %129 = tpu.dynamic_rotate %107 by %c1_i32_45 dim 1 : vector<8x256xf32>, i32 -> vector<8x256xf32>
    %cst_46 = arith.constant 0.128572613 : f32
    %130 = vector.broadcast %cst_46 : f32 to vector<8x256xf32>
    %131 = arith.mulf %130, %129 : vector<8x256xf32>
    %132 = arith.addf %128, %131 : vector<8x256xf32>
    %c255_i32_47 = arith.constant 255 : i32
    %133 = tpu.dynamic_rotate %95 by %c255_i32_47 dim 1 : vector<8x256xf32>, i32 -> vector<8x256xf32>
    %cst_48 = arith.constant 0.128572613 : f32
    %134 = vector.broadcast %cst_48 : f32 to vector<8x256xf32>
    %135 = arith.mulf %134, %133 : vector<8x256xf32>
    %136 = arith.addf %132, %135 : vector<8x256xf32>
    %c255_i32_49 = arith.constant 255 : i32
    %137 = tpu.dynamic_rotate %107 by %c255_i32_49 dim 1 : vector<8x256xf32>, i32 -> vector<8x256xf32>
    %cst_50 = arith.constant -0.0576573759 : f32
    %138 = vector.broadcast %cst_50 : f32 to vector<8x256xf32>
    %139 = arith.mulf %138, %137 : vector<8x256xf32>
    %140 = arith.addf %136, %139 : vector<8x256xf32>
    %c254_i32_51 = arith.constant 254 : i32
    %141 = tpu.dynamic_rotate %95 by %c254_i32_51 dim 1 : vector<8x256xf32>, i32 -> vector<8x256xf32>
    %cst_52 = arith.constant -0.0255434643 : f32
    %142 = vector.broadcast %cst_52 : f32 to vector<8x256xf32>
    %143 = arith.mulf %142, %141 : vector<8x256xf32>
    %144 = arith.addf %140, %143 : vector<8x256xf32>
    %c254_i32_53 = arith.constant 254 : i32
    %145 = tpu.dynamic_rotate %107 by %c254_i32_53 dim 1 : vector<8x256xf32>, i32 -> vector<8x256xf32>
    %cst_54 = arith.constant 0.00938946381 : f32
    %146 = vector.broadcast %cst_54 : f32 to vector<8x256xf32>
    %147 = arith.mulf %146, %145 : vector<8x256xf32>
    %148 = arith.addf %144, %147 : vector<8x256xf32>
    %c253_i32_55 = arith.constant 253 : i32
    %149 = tpu.dynamic_rotate %95 by %c253_i32_55 dim 1 : vector<8x256xf32>, i32 -> vector<8x256xf32>
    %cst_56 = arith.constant 0.00202896656 : f32
    %150 = vector.broadcast %cst_56 : f32 to vector<8x256xf32>
    %151 = arith.mulf %150, %149 : vector<8x256xf32>
    %152 = arith.addf %148, %151 : vector<8x256xf32>
    %cst_57 = arith.constant 0.000000e+00 : f32
    %153 = vector.shape_cast %22 : vector<1x256xi1> to vector<1x256xi1>
    %154 = vector.broadcast %153 : vector<1x256xi1> to vector<8x256xi1>
    %155 = vector.broadcast %cst_57 : f32 to vector<8x256xf32>
    %156 = arith.select %154, %152, %155 : vector<8x256xi1>, vector<8x256xf32>
    %c1_i32_58 = arith.constant 1 : i32
    %157 = tpu.dynamic_rotate %156 by %c1_i32_58 dim 1 : vector<8x256xf32>, i32 -> vector<8x256xf32>
    %c255_i32_59 = arith.constant 255 : i32
    %158 = tpu.dynamic_rotate %156 by %c255_i32_59 dim 1 : vector<8x256xf32>, i32 -> vector<8x256xf32>
    %159 = tpu.concatenate %157, %156, %158 in 0 : vector<8x256xf32>, vector<8x256xf32>, vector<8x256xf32> -> vector<24x256xf32>
    %160 = arith.truncf %159 : vector<24x256xf32> to vector<24x256xbf16>
    %c0_60 = arith.constant 0 : index
    %c0_61 = arith.constant 0 : index
    %c0_62 = arith.constant 0 : index
    %161 = vector.load %arg3[%c0_60, %c0_61, %c0_62] : memref<2x8x24xbf16, #tpu.memory_space<vmem>>, vector<1x8x24xbf16>
    %162 = vector.shape_cast %161 : vector<1x8x24xbf16> to vector<8x24xbf16>
    %cst_63 = arith.constant dense<0.000000e+00> : vector<8x256xf32>
    %163 = tpu.matmul %162, %160, %cst_63 {dimension_numbers = #tpu.dot_dimension_numbers<[1], [0], [0], [1], [0, 0, 1, 1], [], []>} : vector<8x24xbf16>, vector<24x256xbf16>, vector<8x256xf32> -> vector<8x256xf32>
    %c0_64 = arith.constant 0 : index
    %c0_65 = arith.constant 0 : index
    %c0_66 = arith.constant 0 : index
    %164 = vector.load %arg4[%c0_64, %c0_65, %c0_66] : memref<2x8x1xf32, #tpu.memory_space<vmem>>, vector<1x8x1xf32>
    %165 = vector.shape_cast %164 : vector<1x8x1xf32> to vector<8x1xf32>
    %166 = vector.broadcast %165 : vector<8x1xf32> to vector<8x256xf32>
    %167 = arith.addf %163, %166 : vector<8x256xf32>
    %168 = arith.addf %167, %23 : vector<8x256xf32>
    %c1 = arith.constant 1 : index
    %c0_67 = arith.constant 0 : index
    %c0_68 = arith.constant 0 : index
    %169 = vector.load %arg5[%c1, %c0_67, %c0_68] : memref<2x8x1xf32, #tpu.memory_space<vmem>>, vector<1x8x1xf32>
    %170 = vector.shape_cast %169 : vector<1x8x1xf32> to vector<8x1xf32>
    %c1_69 = arith.constant 1 : index
    %c0_70 = arith.constant 0 : index
    %c0_71 = arith.constant 0 : index
    %171 = vector.load %arg6[%c1_69, %c0_70, %c0_71] : memref<2x8x1xf32, #tpu.memory_space<vmem>>, vector<1x8x1xf32>
    %172 = vector.shape_cast %171 : vector<1x8x1xf32> to vector<8x1xf32>
    %173 = arith.extui %2 : i1 to i32
    %c0_i32_72 = arith.constant 0 : i32
    %174 = arith.cmpi ne, %173, %c0_i32_72 : i32
    scf.if %174 {
      %c0_i32_139 = arith.constant 0 : i32
      %332 = vector.broadcast %c0_i32_139 : i32 to vector<1x256xi32>
      %333 = arith.cmpi eq, %13, %332 : vector<1x256xi32>
      %cst_140 = arith.constant 0.000000e+00 : f32
      %334 = vector.shape_cast %333 : vector<1x256xi1> to vector<1x256xi1>
      %335 = vector.broadcast %334 : vector<1x256xi1> to vector<8x256xi1>
      %336 = vector.broadcast %cst_140 : f32 to vector<8x256xf32>
      %337 = arith.select %335, %168, %336 : vector<8x256xi1>, vector<8x256xf32>
      %cst_141 = arith.constant dense<0.000000e+00> : vector<8xf32>
      %338 = vector.multi_reduction <add>, %337, %cst_141 [1] : vector<8x256xf32> to vector<8xf32>
      %339 = vector.shape_cast %338 : vector<8xf32> to vector<8x1xf32>
      %c0_142 = arith.constant 0 : index
      %c0_143 = arith.constant 0 : index
      %340 = vector.load %arg9[%c0_142, %c0_143] : memref<8x1xf32, #tpu.memory_space<vmem>>, vector<8x1xf32>
      tpu.vector_store %arg9[%c0_142, %c0_143], %339 {strides = array<i32>} : memref<8x1xf32, #tpu.memory_space<vmem>>, vector<8x1xf32>,
      %c15_i32 = arith.constant 15 : i32
      %341 = vector.broadcast %c15_i32 : i32 to vector<1x256xi32>
      %342 = arith.cmpi eq, %13, %341 : vector<1x256xi32>
      %cst_144 = arith.constant 0.000000e+00 : f32
      %343 = vector.shape_cast %342 : vector<1x256xi1> to vector<1x256xi1>
      %344 = vector.broadcast %343 : vector<1x256xi1> to vector<8x256xi1>
      %345 = vector.broadcast %cst_144 : f32 to vector<8x256xf32>
      %346 = arith.select %344, %168, %345 : vector<8x256xi1>, vector<8x256xf32>
      %cst_145 = arith.constant dense<0.000000e+00> : vector<8xf32>
      %347 = vector.multi_reduction <add>, %346, %cst_145 [1] : vector<8x256xf32> to vector<8xf32>
      %348 = vector.shape_cast %347 : vector<8xf32> to vector<8x1xf32>
      %c0_146 = arith.constant 0 : index
      %c0_147 = arith.constant 0 : index
      %349 = vector.load %arg10[%c0_146, %c0_147] : memref<8x1xf32, #tpu.memory_space<vmem>>, vector<8x1xf32>
      tpu.vector_store %arg10[%c0_146, %c0_147], %348 {strides = array<i32>} : memref<8x1xf32, #tpu.memory_space<vmem>>, vector<8x1xf32>,
    } else {
    }
    %c0_73 = arith.constant 0 : index
    %c0_74 = arith.constant 0 : index
    %175 = vector.load %arg9[%c0_73, %c0_74] : memref<8x1xf32, #tpu.memory_space<vmem>>, vector<8x1xf32>
    %c0_75 = arith.constant 0 : index
    %c0_76 = arith.constant 0 : index
    %176 = vector.load %arg10[%c0_75, %c0_76] : memref<8x1xf32, #tpu.memory_space<vmem>>, vector<8x1xf32>
    %177 = vector.shape_cast %17 : vector<1x256xi1> to vector<1x256xi1>
    %178 = vector.broadcast %177 : vector<1x256xi1> to vector<8x256xi1>
    %179 = vector.shape_cast %176 : vector<8x1xf32> to vector<8x1xf32>
    %180 = vector.broadcast %179 : vector<8x1xf32> to vector<8x256xf32>
    %181 = arith.select %178, %180, %168 : vector<8x256xi1>, vector<8x256xf32>
    %182 = vector.shape_cast %15 : vector<1x256xi1> to vector<1x256xi1>
    %183 = vector.broadcast %182 : vector<1x256xi1> to vector<8x256xi1>
    %184 = vector.shape_cast %175 : vector<8x1xf32> to vector<8x1xf32>
    %185 = vector.broadcast %184 : vector<8x1xf32> to vector<8x256xf32>
    %186 = arith.select %183, %185, %181 : vector<8x256xi1>, vector<8x256xf32>
    %cst_77 = arith.constant 0.886419594 : f32
    %187 = vector.broadcast %cst_77 : f32 to vector<8x256xf32>
    %188 = arith.mulf %187, %186 : vector<8x256xf32>
    %cst_78 = arith.constant 0.886419594 : f32
    %189 = vector.broadcast %cst_78 : f32 to vector<8x256xf32>
    %190 = arith.mulf %189, %186 : vector<8x256xf32>
    %c3_i32_79 = arith.constant 3 : i32
    %191 = tpu.dynamic_rotate %186 by %c3_i32_79 dim 1 : vector<8x256xf32>, i32 -> vector<8x256xf32>
    %cst_80 = arith.constant 0.00405793311 : f32
    %192 = vector.broadcast %cst_80 : f32 to vector<8x256xf32>
    %193 = arith.mulf %192, %191 : vector<8x256xf32>
    %194 = arith.addf %188, %193 : vector<8x256xf32>
    %c2_i32_81 = arith.constant 2 : i32
    %195 = tpu.dynamic_rotate %186 by %c2_i32_81 dim 1 : vector<8x256xf32>, i32 -> vector<8x256xf32>
    %cst_82 = arith.constant -0.0510869287 : f32
    %196 = vector.broadcast %cst_82 : f32 to vector<8x256xf32>
    %197 = arith.mulf %196, %195 : vector<8x256xf32>
    %198 = arith.addf %194, %197 : vector<8x256xf32>
    %cst_83 = arith.constant 0.0187789276 : f32
    %199 = vector.broadcast %cst_83 : f32 to vector<8x256xf32>
    %200 = arith.mulf %199, %195 : vector<8x256xf32>
    %201 = arith.addf %190, %200 : vector<8x256xf32>
    %c1_i32_84 = arith.constant 1 : i32
    %202 = tpu.dynamic_rotate %186 by %c1_i32_84 dim 1 : vector<8x256xf32>, i32 -> vector<8x256xf32>
    %cst_85 = arith.constant 0.257145226 : f32
    %203 = vector.broadcast %cst_85 : f32 to vector<8x256xf32>
    %204 = arith.mulf %203, %202 : vector<8x256xf32>
    %205 = arith.addf %198, %204 : vector<8x256xf32>
    %cst_86 = arith.constant -0.115314752 : f32
    %206 = vector.broadcast %cst_86 : f32 to vector<8x256xf32>
    %207 = arith.mulf %206, %202 : vector<8x256xf32>
    %208 = arith.addf %201, %207 : vector<8x256xf32>
    %c255_i32_87 = arith.constant 255 : i32
    %209 = tpu.dynamic_rotate %186 by %c255_i32_87 dim 1 : vector<8x256xf32>, i32 -> vector<8x256xf32>
    %cst_88 = arith.constant -0.115314752 : f32
    %210 = vector.broadcast %cst_88 : f32 to vector<8x256xf32>
    %211 = arith.mulf %210, %209 : vector<8x256xf32>
    %212 = arith.addf %205, %211 : vector<8x256xf32>
    %cst_89 = arith.constant 0.257145226 : f32
    %213 = vector.broadcast %cst_89 : f32 to vector<8x256xf32>
    %214 = arith.mulf %213, %209 : vector<8x256xf32>
    %215 = arith.addf %208, %214 : vector<8x256xf32>
    %c254_i32_90 = arith.constant 254 : i32
    %216 = tpu.dynamic_rotate %186 by %c254_i32_90 dim 1 : vector<8x256xf32>, i32 -> vector<8x256xf32>
    %cst_91 = arith.constant 0.0187789276 : f32
    %217 = vector.broadcast %cst_91 : f32 to vector<8x256xf32>
    %218 = arith.mulf %217, %216 : vector<8x256xf32>
    %219 = arith.addf %212, %218 : vector<8x256xf32>
    %cst_92 = arith.constant -0.0510869287 : f32
    %220 = vector.broadcast %cst_92 : f32 to vector<8x256xf32>
    %221 = arith.mulf %220, %216 : vector<8x256xf32>
    %222 = arith.addf %215, %221 : vector<8x256xf32>
    %c253_i32_93 = arith.constant 253 : i32
    %223 = tpu.dynamic_rotate %186 by %c253_i32_93 dim 1 : vector<8x256xf32>, i32 -> vector<8x256xf32>
    %cst_94 = arith.constant 0.00405793311 : f32
    %224 = vector.broadcast %cst_94 : f32 to vector<8x256xf32>
    %225 = arith.mulf %224, %223 : vector<8x256xf32>
    %226 = arith.addf %222, %225 : vector<8x256xf32>
    %227 = vector.broadcast %170 : vector<8x1xf32> to vector<8x256xf32>
    %228 = arith.mulf %219, %227 : vector<8x256xf32>
    %229 = math.sin %228 : vector<8x256xf32>
    %230 = vector.broadcast %170 : vector<8x1xf32> to vector<8x256xf32>
    %231 = arith.mulf %226, %230 : vector<8x256xf32>
    %232 = math.sin %231 : vector<8x256xf32>
    %233 = vector.broadcast %172 : vector<8x1xf32> to vector<8x256xf32>
    %234 = arith.mulf %233, %229 : vector<8x256xf32>
    %235 = arith.mulf %234, %229 : vector<8x256xf32>
    %236 = arith.addf %219, %235 : vector<8x256xf32>
    %237 = vector.broadcast %172 : vector<8x1xf32> to vector<8x256xf32>
    %238 = arith.mulf %237, %232 : vector<8x256xf32>
    %239 = arith.mulf %238, %232 : vector<8x256xf32>
    %240 = arith.addf %226, %239 : vector<8x256xf32>
    %241 = arith.extui %2 : i1 to i32
    %c0_i32_95 = arith.constant 0 : i32
    %242 = arith.cmpi ne, %241, %c0_i32_95 : i32
    scf.if %242 {
      %c0_i32_139 = arith.constant 0 : i32
      %332 = vector.broadcast %c0_i32_139 : i32 to vector<1x256xi32>
      %333 = arith.cmpi eq, %13, %332 : vector<1x256xi32>
      %cst_140 = arith.constant 0.000000e+00 : f32
      %334 = vector.shape_cast %333 : vector<1x256xi1> to vector<1x256xi1>
      %335 = vector.broadcast %334 : vector<1x256xi1> to vector<8x256xi1>
      %336 = vector.broadcast %cst_140 : f32 to vector<8x256xf32>
      %337 = arith.select %335, %236, %336 : vector<8x256xi1>, vector<8x256xf32>
      %cst_141 = arith.constant dense<0.000000e+00> : vector<8xf32>
      %338 = vector.multi_reduction <add>, %337, %cst_141 [1] : vector<8x256xf32> to vector<8xf32>
      %339 = vector.shape_cast %338 : vector<8xf32> to vector<8x1xf32>
      %c0_142 = arith.constant 0 : index
      %c0_143 = arith.constant 0 : index
      %340 = vector.load %arg9[%c0_142, %c0_143] : memref<8x1xf32, #tpu.memory_space<vmem>>, vector<8x1xf32>
      tpu.vector_store %arg9[%c0_142, %c0_143], %339 {strides = array<i32>} : memref<8x1xf32, #tpu.memory_space<vmem>>, vector<8x1xf32>,
      %c15_i32 = arith.constant 15 : i32
      %341 = vector.broadcast %c15_i32 : i32 to vector<1x256xi32>
      %342 = arith.cmpi eq, %13, %341 : vector<1x256xi32>
      %cst_144 = arith.constant 0.000000e+00 : f32
      %343 = vector.shape_cast %342 : vector<1x256xi1> to vector<1x256xi1>
      %344 = vector.broadcast %343 : vector<1x256xi1> to vector<8x256xi1>
      %345 = vector.broadcast %cst_144 : f32 to vector<8x256xf32>
      %346 = arith.select %344, %240, %345 : vector<8x256xi1>, vector<8x256xf32>
      %cst_145 = arith.constant dense<0.000000e+00> : vector<8xf32>
      %347 = vector.multi_reduction <add>, %346, %cst_145 [1] : vector<8x256xf32> to vector<8xf32>
      %348 = vector.shape_cast %347 : vector<8xf32> to vector<8x1xf32>
      %c0_146 = arith.constant 0 : index
      %c0_147 = arith.constant 0 : index
      %349 = vector.load %arg10[%c0_146, %c0_147] : memref<8x1xf32, #tpu.memory_space<vmem>>, vector<8x1xf32>
      tpu.vector_store %arg10[%c0_146, %c0_147], %348 {strides = array<i32>} : memref<8x1xf32, #tpu.memory_space<vmem>>, vector<8x1xf32>,
    } else {
    }
    %c0_96 = arith.constant 0 : index
    %c0_97 = arith.constant 0 : index
    %243 = vector.load %arg9[%c0_96, %c0_97] : memref<8x1xf32, #tpu.memory_space<vmem>>, vector<8x1xf32>
    %c0_98 = arith.constant 0 : index
    %c0_99 = arith.constant 0 : index
    %244 = vector.load %arg10[%c0_98, %c0_99] : memref<8x1xf32, #tpu.memory_space<vmem>>, vector<8x1xf32>
    %245 = vector.shape_cast %17 : vector<1x256xi1> to vector<1x256xi1>
    %246 = vector.broadcast %245 : vector<1x256xi1> to vector<8x256xi1>
    %247 = vector.shape_cast %244 : vector<8x1xf32> to vector<8x1xf32>
    %248 = vector.broadcast %247 : vector<8x1xf32> to vector<8x256xf32>
    %249 = arith.select %246, %248, %236 : vector<8x256xi1>, vector<8x256xf32>
    %250 = vector.shape_cast %15 : vector<1x256xi1> to vector<1x256xi1>
    %251 = vector.broadcast %250 : vector<1x256xi1> to vector<8x256xi1>
    %252 = vector.shape_cast %243 : vector<8x1xf32> to vector<8x1xf32>
    %253 = vector.broadcast %252 : vector<8x1xf32> to vector<8x256xf32>
    %254 = arith.select %251, %253, %249 : vector<8x256xi1>, vector<8x256xf32>
    %c0_100 = arith.constant 0 : index
    %c0_101 = arith.constant 0 : index
    %255 = vector.load %arg9[%c0_100, %c0_101] : memref<8x1xf32, #tpu.memory_space<vmem>>, vector<8x1xf32>
    %c0_102 = arith.constant 0 : index
    %c0_103 = arith.constant 0 : index
    %256 = vector.load %arg10[%c0_102, %c0_103] : memref<8x1xf32, #tpu.memory_space<vmem>>, vector<8x1xf32>
    %257 = vector.shape_cast %17 : vector<1x256xi1> to vector<1x256xi1>
    %258 = vector.broadcast %257 : vector<1x256xi1> to vector<8x256xi1>
    %259 = vector.shape_cast %256 : vector<8x1xf32> to vector<8x1xf32>
    %260 = vector.broadcast %259 : vector<8x1xf32> to vector<8x256xf32>
    %261 = arith.select %258, %260, %240 : vector<8x256xi1>, vector<8x256xf32>
    %262 = vector.shape_cast %15 : vector<1x256xi1> to vector<1x256xi1>
    %263 = vector.broadcast %262 : vector<1x256xi1> to vector<8x256xi1>
    %264 = vector.shape_cast %255 : vector<8x1xf32> to vector<8x1xf32>
    %265 = vector.broadcast %264 : vector<8x1xf32> to vector<8x256xf32>
    %266 = arith.select %263, %265, %261 : vector<8x256xi1>, vector<8x256xf32>
    %cst_104 = arith.constant 0.443209797 : f32
    %267 = vector.broadcast %cst_104 : f32 to vector<8x256xf32>
    %268 = arith.mulf %267, %254 : vector<8x256xf32>
    %cst_105 = arith.constant 0.443209797 : f32
    %269 = vector.broadcast %cst_105 : f32 to vector<8x256xf32>
    %270 = arith.mulf %269, %266 : vector<8x256xf32>
    %271 = arith.addf %268, %270 : vector<8x256xf32>
    %c3_i32_106 = arith.constant 3 : i32
    %272 = tpu.dynamic_rotate %266 by %c3_i32_106 dim 1 : vector<8x256xf32>, i32 -> vector<8x256xf32>
    %cst_107 = arith.constant 0.00202896656 : f32
    %273 = vector.broadcast %cst_107 : f32 to vector<8x256xf32>
    %274 = arith.mulf %273, %272 : vector<8x256xf32>
    %275 = arith.addf %271, %274 : vector<8x256xf32>
    %c2_i32_108 = arith.constant 2 : i32
    %276 = tpu.dynamic_rotate %254 by %c2_i32_108 dim 1 : vector<8x256xf32>, i32 -> vector<8x256xf32>
    %cst_109 = arith.constant 0.00938946381 : f32
    %277 = vector.broadcast %cst_109 : f32 to vector<8x256xf32>
    %278 = arith.mulf %277, %276 : vector<8x256xf32>
    %279 = arith.addf %275, %278 : vector<8x256xf32>
    %c2_i32_110 = arith.constant 2 : i32
    %280 = tpu.dynamic_rotate %266 by %c2_i32_110 dim 1 : vector<8x256xf32>, i32 -> vector<8x256xf32>
    %cst_111 = arith.constant -0.0255434643 : f32
    %281 = vector.broadcast %cst_111 : f32 to vector<8x256xf32>
    %282 = arith.mulf %281, %280 : vector<8x256xf32>
    %283 = arith.addf %279, %282 : vector<8x256xf32>
    %c1_i32_112 = arith.constant 1 : i32
    %284 = tpu.dynamic_rotate %254 by %c1_i32_112 dim 1 : vector<8x256xf32>, i32 -> vector<8x256xf32>
    %cst_113 = arith.constant -0.0576573759 : f32
    %285 = vector.broadcast %cst_113 : f32 to vector<8x256xf32>
    %286 = arith.mulf %285, %284 : vector<8x256xf32>
    %287 = arith.addf %283, %286 : vector<8x256xf32>
    %c1_i32_114 = arith.constant 1 : i32
    %288 = tpu.dynamic_rotate %266 by %c1_i32_114 dim 1 : vector<8x256xf32>, i32 -> vector<8x256xf32>
    %cst_115 = arith.constant 0.128572613 : f32
    %289 = vector.broadcast %cst_115 : f32 to vector<8x256xf32>
    %290 = arith.mulf %289, %288 : vector<8x256xf32>
    %291 = arith.addf %287, %290 : vector<8x256xf32>
    %c255_i32_116 = arith.constant 255 : i32
    %292 = tpu.dynamic_rotate %254 by %c255_i32_116 dim 1 : vector<8x256xf32>, i32 -> vector<8x256xf32>
    %cst_117 = arith.constant 0.128572613 : f32
    %293 = vector.broadcast %cst_117 : f32 to vector<8x256xf32>
    %294 = arith.mulf %293, %292 : vector<8x256xf32>
    %295 = arith.addf %291, %294 : vector<8x256xf32>
    %c255_i32_118 = arith.constant 255 : i32
    %296 = tpu.dynamic_rotate %266 by %c255_i32_118 dim 1 : vector<8x256xf32>, i32 -> vector<8x256xf32>
    %cst_119 = arith.constant -0.0576573759 : f32
    %297 = vector.broadcast %cst_119 : f32 to vector<8x256xf32>
    %298 = arith.mulf %297, %296 : vector<8x256xf32>
    %299 = arith.addf %295, %298 : vector<8x256xf32>
    %c254_i32_120 = arith.constant 254 : i32
    %300 = tpu.dynamic_rotate %254 by %c254_i32_120 dim 1 : vector<8x256xf32>, i32 -> vector<8x256xf32>
    %cst_121 = arith.constant -0.0255434643 : f32
    %301 = vector.broadcast %cst_121 : f32 to vector<8x256xf32>
    %302 = arith.mulf %301, %300 : vector<8x256xf32>
    %303 = arith.addf %299, %302 : vector<8x256xf32>
    %c254_i32_122 = arith.constant 254 : i32
    %304 = tpu.dynamic_rotate %266 by %c254_i32_122 dim 1 : vector<8x256xf32>, i32 -> vector<8x256xf32>
    %cst_123 = arith.constant 0.00938946381 : f32
    %305 = vector.broadcast %cst_123 : f32 to vector<8x256xf32>
    %306 = arith.mulf %305, %304 : vector<8x256xf32>
    %307 = arith.addf %303, %306 : vector<8x256xf32>
    %c253_i32_124 = arith.constant 253 : i32
    %308 = tpu.dynamic_rotate %254 by %c253_i32_124 dim 1 : vector<8x256xf32>, i32 -> vector<8x256xf32>
    %cst_125 = arith.constant 0.00202896656 : f32
    %309 = vector.broadcast %cst_125 : f32 to vector<8x256xf32>
    %310 = arith.mulf %309, %308 : vector<8x256xf32>
    %311 = arith.addf %307, %310 : vector<8x256xf32>
    %cst_126 = arith.constant 0.000000e+00 : f32
    %312 = vector.shape_cast %22 : vector<1x256xi1> to vector<1x256xi1>
    %313 = vector.broadcast %312 : vector<1x256xi1> to vector<8x256xi1>
    %314 = vector.broadcast %cst_126 : f32 to vector<8x256xf32>
    %315 = arith.select %313, %311, %314 : vector<8x256xi1>, vector<8x256xf32>
    %c3_i32_127 = arith.constant 3 : i32
    %316 = tpu.dynamic_rotate %315 by %c3_i32_127 dim 1 : vector<8x256xf32>, i32 -> vector<8x256xf32>
    %c253_i32_128 = arith.constant 253 : i32
    %317 = tpu.dynamic_rotate %315 by %c253_i32_128 dim 1 : vector<8x256xf32>, i32 -> vector<8x256xf32>
    %318 = tpu.concatenate %316, %315, %317 in 0 : vector<8x256xf32>, vector<8x256xf32>, vector<8x256xf32> -> vector<24x256xf32>
    %319 = arith.truncf %318 : vector<24x256xf32> to vector<24x256xbf16>
    %c1_129 = arith.constant 1 : index
    %c0_130 = arith.constant 0 : index
    %c0_131 = arith.constant 0 : index
    %320 = vector.load %arg3[%c1_129, %c0_130, %c0_131] : memref<2x8x24xbf16, #tpu.memory_space<vmem>>, vector<1x8x24xbf16>
    %321 = vector.shape_cast %320 : vector<1x8x24xbf16> to vector<8x24xbf16>
    %cst_132 = arith.constant dense<0.000000e+00> : vector<8x256xf32>
    %322 = tpu.matmul %321, %319, %cst_132 {dimension_numbers = #tpu.dot_dimension_numbers<[1], [0], [0], [1], [0, 0, 1, 1], [], []>} : vector<8x24xbf16>, vector<24x256xbf16>, vector<8x256xf32> -> vector<8x256xf32>
    %c1_133 = arith.constant 1 : index
    %c0_134 = arith.constant 0 : index
    %c0_135 = arith.constant 0 : index
    %323 = vector.load %arg4[%c1_133, %c0_134, %c0_135] : memref<2x8x1xf32, #tpu.memory_space<vmem>>, vector<1x8x1xf32>
    %324 = vector.shape_cast %323 : vector<1x8x1xf32> to vector<8x1xf32>
    %325 = vector.broadcast %324 : vector<8x1xf32> to vector<8x256xf32>
    %326 = arith.addf %322, %325 : vector<8x256xf32>
    %327 = arith.addf %326, %168 : vector<8x256xf32>
    %328 = vector.extract_strided_slice %327 {offsets = [0, 16], sizes = [8, 128], strides = [1, 1]} : vector<8x256xf32> to vector<8x128xf32>
    %c0_136 = arith.constant 0 : index
    %c0_137 = arith.constant 0 : index
    %c0_138 = arith.constant 0 : index
    %329 = vector.load %arg7[%c0_136, %c0_137, %c0_138] : memref<1x8x128xf32, #tpu.memory_space<vmem>>, vector<1x8x128xf32>
    %330 = vector.shape_cast %329 : vector<1x8x128xf32> to vector<8x128xf32>
    %331 = vector.shape_cast %328 : vector<8x128xf32> to vector<1x8x128xf32>
    tpu.vector_store %arg7[%c0_136, %c0_137, %c0_138], %331 {strides = array<i32>} : memref<1x8x128xf32, #tpu.memory_space<vmem>>, vector<1x8x128xf32>,
    return
  }
  func.func @transform_1(%arg0: i32, %arg1: i32) -> (i32, i32, i32) {
    %c0_i32 = arith.constant 0 : i32
    %c0_i32_0 = arith.constant 0 : i32
    %c0_i32_1 = arith.constant 0 : i32
    %c0_i32_2 = arith.constant 0 : i32
    return %c0_i32, %c0_i32_0, %c0_i32_1 : i32, i32, i32
  }
  func.func @transform_2(%arg0: i32, %arg1: i32) -> (i32, i32, i32) {
    %c0_i32 = arith.constant 0 : i32
    %c0_i32_0 = arith.constant 0 : i32
    %c0_i32_1 = arith.constant 0 : i32
    %c0_i32_2 = arith.constant 0 : i32
    return %c0_i32, %c0_i32_0, %c0_i32_1 : i32, i32, i32
  }
  func.func @transform_3(%arg0: i32, %arg1: i32) -> (i32, i32, i32) {
    %c0_i32 = arith.constant 0 : i32
    %c0_i32_0 = arith.constant 0 : i32
    %c0_i32_1 = arith.constant 0 : i32
    %c0_i32_2 = arith.constant 0 : i32
    return %c0_i32, %c0_i32_0, %c0_i32_1 : i32, i32, i32
  }
  func.func @transform_4(%arg0: i32, %arg1: i32) -> (i32, i32, i32) {
    %c0_i32 = arith.constant 0 : i32
    %c0_i32_0 = arith.constant 0 : i32
    %c0_i32_1 = arith.constant 0 : i32
    %c0_i32_2 = arith.constant 0 : i32
    return %c0_i32, %c0_i32_0, %c0_i32_1 : i32, i32, i32
  }
  func.func @transform_5(%arg0: i32, %arg1: i32) -> (i32, i32, i32) {
    %c0_i32 = arith.constant 0 : i32
    %c0_i32_0 = arith.constant 0 : i32
    return %arg0, %c0_i32, %arg1 : i32, i32, i32
  }
}

</mosaic_0001>

<llo_original>
// kernel: _lambda_.1
$region0: #{_lambda_.1}
  #allocation0 [shape = 'u32[]', space=smem, size = 0x4, offset = 0x4, fixed_abs, tag = 'smem constant byte address 0x4 - core index']
  #allocation1 [shape = 'u32[144,128]{1,0:T(1,128)}', space=vmem, size = 0x12000, scoped, tag = 'internal scratch']
  #allocation2 [shape = 'f32[8,256]{1,0:T(8,128)}', space=vmem, size = 0x2000, scoped, tag = 'scratch operand']
  #allocation3 [shape = 'f32[8,1]{1,0:T(8,128)}', space=vmem, size = 0x1000, scoped, tag = 'scratch operand']
  #allocation4 [shape = 'f32[8,1]{1,0:T(8,128)}', space=vmem, size = 0x1000, scoped, tag = 'scratch operand']
  #allocation5 [shape = 's32[1]{0}', space=sflag, size = 0x4, scoped, tag = 'scratch operand']
  #allocation8 [shape = 's32[]', space=sflag, size = 0x4, offset = 0, fixed_abs, tag = 'sflag constant byte address 0x0 - dummy sync flag']
  %s0 = inlined_call_operand.vmem [shape: f32[2,8,256], index: 0, kind: input, shape index: {}]
  %s1 = inlined_call_operand.vmem [shape: bf16[2,8,24], index: 1, kind: input, shape index: {}]
  %s2 = inlined_call_operand.vmem [shape: f32[2,8,1], index: 2, kind: input, shape index: {}]
  %s3 = inlined_call_operand.vmem [shape: f32[2,8,1], index: 3, kind: input, shape index: {}]
  %s4 = inlined_call_operand.vmem [shape: f32[2,8,1], index: 4, kind: input, shape index: {}]
  %s5 = inlined_call_operand.hbm [shape: f32[2,8,128], index: 5, kind: output, shape index: {}]
  %s6 = sld [smem:[#allocation0]]
  $region95: #{_lambda_.1} parent=0
    _
  %s8 = ssub.s32 1, %s6
  %s9 = scalar_select 0, %s8, %s6
  $region1: #{_lambda_.1} parent=0
    #allocation6 [shape = 'u8[8192]{0}', space=vmem, size = 0x2000, scoped, tag = 'output window, operand 0']
    #allocation7 [shape = 's32[2]{0}', space=sflag, size = 0x8, scoped, tag = 'scoped memory for _lambda_.1']
    %10 = vsyncpa [#allocation7], 0
    %s11 = scalar_lea.sflag [#allocation7], 1
    %12 = vsyncpa %s11, 0
    loop: start=0, step=1, limit=4
    $region2: #{_lambda_.1} parent=1 // loop_pre_header
      _
    $region3: #{_lambda_.1} parent=1 // loop_header
      %s14 = sphi 0, %s18
      %p15 = scmp.ge.s32.totalorder %s14, 4
      %s21 = sphi 0, %s33
      %s22 = sphi 0, %s29
      %s23 = sphi 0, %s21
      %s24 = sphi 0, %s22
      %s25 = sphi 0, %s23
      %s26 = sphi 0, %s24
      %s34 = sphi 0, %s34
      %s36 = sphi 0, %s34
      %s37 = sphi 0, %s36
      %s51 = sphi 0, %s37
      %s55 = sphi 0, %s55
      %s57 = sphi 0, %s55
      %s58 = sphi 0, %s57
      %s72 = sphi 0, %s58
      %s76 = sphi 0, %s76
      %s78 = sphi 0, %s76
      %s79 = sphi 0, %s78
      %s93 = sphi 0, %s79
      %s97 = sphi 0, %s97
      %s99 = sphi 0, %s97
      %s100 = sphi 0, %s99
      %s114 = sphi 0, %s100
      %s122 = sphi 0, %s124
      %s125 = sphi 0, %s122
      %s126 = sphi 0, %s125
      %s142 = sphi 0, %s126
    $region4: #{_lambda_.1} parent=1 // loop_header_branch
      %17 = sbr.rel (%p15) target = $region8
    $region5: #{_lambda_.1} parent=1 // loop_body
      %s19 = ssub.s32 %s14, 1
      %s20 = ssub.s32 %s14, 2
      %s27 = sadd.s32 1, %s22
      %p28 = scmp.ge.s32.totalorder %s27, 1
      %s29 = scalar_select %p28, 0, %s27
      %s30 = sadd.s32 1, %s21
      %s31 = scalar_select %p28, %s30, %s21
      %p32 = scmp.ge.s32.totalorder %s31, 2
      %s33 = scalar_select %p32, 0, %s31
      %s35 = sadd.s32 %s34, 1
      %p38 = scmp.eq.s32.totalorder %s14, 1
      %p39 = scmp.ne.s32.totalorder %s34, %s36
      %p40 = scmp.eq.s32.totalorder %s14, 0
      %p41 = por %p39, %p40
      %p42 = scmp.ne.s32.totalorder %s34, %s36
      %p43 = scmp.eq.s32.totalorder %s19, 1
      %p44 = por %p42, %p43
      %p45 = scmp.ne.s32.totalorder %s36, %s37
      %p46 = scmp.eq.s32.totalorder %s19, 0
      %p47 = por %p45, %p46
      %p48 = scmp.ne.s32.totalorder %s36, %s37
      %p49 = scmp.eq.s32.totalorder %s20, 1
      %p50 = por %p48, %p49
      %p52 = scmp.ne.s32.totalorder %s37, %s51
      %p53 = scmp.eq.s32.totalorder %s20, 0
      %p54 = por %p52, %p53
      %s56 = sadd.s32 %s55, 1
      %p59 = scmp.eq.s32.totalorder %s14, 1
      %p60 = scmp.ne.s32.totalorder %s55, %s57
      %p61 = scmp.eq.s32.totalorder %s14, 0
      %p62 = por %p60, %p61
      %p63 = scmp.ne.s32.totalorder %s55, %s57
      %p64 = scmp.eq.s32.totalorder %s19, 1
      %p65 = por %p63, %p64
      %p66 = scmp.ne.s32.totalorder %s57, %s58
      %p67 = scmp.eq.s32.totalorder %s19, 0
      %p68 = por %p66, %p67
      %p69 = scmp.ne.s32.totalorder %s57, %s58
      %p70 = scmp.eq.s32.totalorder %s20, 1
      %p71 = por %p69, %p70
      %p73 = scmp.ne.s32.totalorder %s58, %s72
      %p74 = scmp.eq.s32.totalorder %s20, 0
      %p75 = por %p73, %p74
      %s77 = sadd.s32 %s76, 1
      %p80 = scmp.eq.s32.totalorder %s14, 1
      %p81 = scmp.ne.s32.totalorder %s76, %s78
      %p82 = scmp.eq.s32.totalorder %s14, 0
      %p83 = por %p81, %p82
      %p84 = scmp.ne.s32.totalorder %s76, %s78
      %p85 = scmp.eq.s32.totalorder %s19, 1
      %p86 = por %p84, %p85
      %p87 = scmp.ne.s32.totalorder %s78, %s79
      %p88 = scmp.eq.s32.totalorder %s19, 0
      %p89 = por %p87, %p88
      %p90 = scmp.ne.s32.totalorder %s78, %s79
      %p91 = scmp.eq.s32.totalorder %s20, 1
      %p92 = por %p90, %p91
      %p94 = scmp.ne.s32.totalorder %s79, %s93
      %p95 = scmp.eq.s32.totalorder %s20, 0
      %p96 = por %p94, %p95
      %s98 = sadd.s32 %s97, 1
      %p101 = scmp.eq.s32.totalorder %s14, 1
      %p102 = scmp.ne.s32.totalorder %s97, %s99
      %p103 = scmp.eq.s32.totalorder %s14, 0
      %p104 = por %p102, %p103
      %p105 = scmp.ne.s32.totalorder %s97, %s99
      %p106 = scmp.eq.s32.totalorder %s19, 1
      %p107 = por %p105, %p106
      %p108 = scmp.ne.s32.totalorder %s99, %s100
      %p109 = scmp.eq.s32.totalorder %s19, 0
      %p110 = por %p108, %p109
      %p111 = scmp.ne.s32.totalorder %s99, %s100
      %p112 = scmp.eq.s32.totalorder %s20, 1
      %p113 = por %p111, %p112
      %p115 = scmp.ne.s32.totalorder %s100, %s114
      %p116 = scmp.eq.s32.totalorder %s20, 0
      %p117 = por %p115, %p116
      %s118 = ssub.s32 %s21, %s33
      %s119 = ssub.s32 %s22, %s29
      %s120 = sor.u32 %s118, %s119
      %p121 = scmp.eq.s32.totalorder %s120, 0
      %s123 = sadd.s32 %s122, 1
      %s124 = scalar_select %p121, %s122, %s123
      %p127 = pneg %p121
      %p128 = scmp.eq.s32.totalorder %s14, 1
      %p129 = por %p127, %p128
      %p130 = scmp.ne.s32.totalorder %s122, %s125
      %p131 = scmp.eq.s32.totalorder %s14, 0
      %p132 = por %p130, %p131
      %p133 = scmp.ne.s32.totalorder %s122, %s125
      %p134 = scmp.eq.s32.totalorder %s19, 1
      %p135 = por %p133, %p134
      %p136 = scmp.ne.s32.totalorder %s125, %s126
      %p137 = scmp.eq.s32.totalorder %s19, 0
      %p138 = por %p136, %p137
      %p139 = scmp.ne.s32.totalorder %s125, %s126
      %p140 = scmp.eq.s32.totalorder %s20, 1
      %p141 = por %p139, %p140
      %p143 = scmp.ne.s32.totalorder %s126, %s142
      %p144 = scmp.eq.s32.totalorder %s20, 0
      %p145 = por %p143, %p144
      %p146 = scmp.le.s32.totalorder 1, %s14
      %p147 = scmp.lt.s32.totalorder %s14, 3
      %p148 = pnand %p146, %p147
      %p149 = pneg %p148
      // Predicated region
      $region9: #{_lambda_.1} parent=5 // pred_check
        _
      $region10: #{_lambda_.1} parent=5 // pred_check_branch
        %151 = sbr.rel (%p148) target = $region12
      $region11: #{_lambda_.1} parent=5 // pred_region
        %s152 = ssub.s32 %s14, 1
        // Predicated region
        $region13: #{_lambda_.1} parent=11 // pred_check
          %p153 = pneg %p47
        $region14: #{_lambda_.1} parent=11 // pred_check_branch
          %155 = sbr.rel (%p153) target = $region16
        $region15: #{_lambda_.1} parent=11 // pred_region
          _
        $region16: #{_lambda_.1} parent=11 // pred_fallthru
          _
        // Predicated region
        $region17: #{_lambda_.1} parent=11 // pred_check
          %p156 = pneg %p68
        $region18: #{_lambda_.1} parent=11 // pred_check_branch
          %158 = sbr.rel (%p156) target = $region20
        $region19: #{_lambda_.1} parent=11 // pred_region
          _
        $region20: #{_lambda_.1} parent=11 // pred_fallthru
          _
        // Predicated region
        $region21: #{_lambda_.1} parent=11 // pred_check
          %p159 = pneg %p89
        $region22: #{_lambda_.1} parent=11 // pred_check_branch
          %161 = sbr.rel (%p159) target = $region24
        $region23: #{_lambda_.1} parent=11 // pred_region
          _
        $region24: #{_lambda_.1} parent=11 // pred_fallthru
          _
        // Predicated region
        $region25: #{_lambda_.1} parent=11 // pred_check
          %p162 = pneg %p110
        $region26: #{_lambda_.1} parent=11 // pred_check_branch
          %164 = sbr.rel (%p162) target = $region28
        $region27: #{_lambda_.1} parent=11 // pred_region
          _
        $region28: #{_lambda_.1} parent=11 // pred_fallthru
          _
      $region12: #{_lambda_.1} parent=5 // pred_fallthru
        _
      %p165 = scmp.lt.s32.totalorder %s14, 2
      // Predicated region
      $region29: #{_lambda_.1} parent=5 // pred_check
        %p166 = pneg %p165
      $region30: #{_lambda_.1} parent=5 // pred_check_branch
        %168 = sbr.rel (%p166) target = $region32
      $region31: #{_lambda_.1} parent=5 // pred_region
        _
      $region32: #{_lambda_.1} parent=5 // pred_fallthru
        _
      %p169 = scmp.le.s32.totalorder 1, %s14
      %p170 = scmp.lt.s32.totalorder %s14, 3
      %p171 = pnand %p169, %p170
      %p172 = pneg %p171
      // Predicated region
      $region33: #{_lambda_.1} parent=5 // pred_check
        _
      $region34: #{_lambda_.1} parent=5 // pred_check_branch
        %174 = sbr.rel (%p171) target = $region36
      $region35: #{_lambda_.1} parent=5 // pred_region
        %s175 = ssub.s32 %s14, 1
        %p176 = pneg %p47
        %p177 = pneg %p44
        %p178 = pneg %p68
        %p179 = pneg %p65
        %p180 = pneg %p89
        %p181 = pneg %p86
        %p182 = pneg %p110
        %p183 = pneg %p107
        %p184 = pneg %p138
        %p185 = pneg %p135
        %s186 = sand.u32 %s125, 1
        %s187 = scalar_lea.sflag [#allocation7], %s186
        %s188 = sand.u32 %s125, 1
        %s189 = smul.addr %s188, 8
        %s190 = scalar_lea.vmem [#allocation6], %s189
        %p192 = scmp.eq.s32.totalorder %s24, 0
        %s193 = smul.u32 %s24, 128
        %s194 = sshra.s32 %s193, 7
        %s195 = sand.u32 %s193, 127
        %s196 = smul.u32 %s23, 2
        %s197 = sadd.s32 %s194, %s196
        %s198 = smul.addr %s197, 8
        %s199 = scalar_lea.vmem %s0, %s198
        %p201 = scmp.lt.u32.totalorder 16, 8
        %p202 = pneg %p201
        // Predicated region
        $region37: #{_lambda_.1} parent=35 // pred_check
          _
        $region38: #{_lambda_.1} parent=35 // pred_check_branch
          %204 = sbr.rel (%p201) target = $region40
        $region39: #{_lambda_.1} parent=35 // pred_region
          %s220 = sand.u32 16, 7
          %p221 = scmp.eq.s32.totalorder %s220, 0
          // Predicated region
          $region52: #{_lambda_.1} parent=39 // pred_check
            %p222 = pneg %p221
          $region53: #{_lambda_.1} parent=39 // pred_check_branch
            %224 = sbr.rel (%p222) target = $region55
          $region54: #{_lambda_.1} parent=39 // pred_region
            loop: start=0, step=1, limit=1
            $region56: #{_lambda_.1} parent=54 // loop_pre_header
              _
            $region57: #{_lambda_.1} parent=54 // loop_header
              %s226 = sphi 0, %s230
              %p227 = scmp.ge.s32.totalorder %s226, 1
              %s231 = sphi %s199, %s199
              %s232 = sphi [#allocation2], [#allocation2]
            $region58: #{_lambda_.1} parent=54 // loop_header_branch
              %229 = sbr.rel (%p227) target = $region62
            $region59: #{_lambda_.1} parent=54 // loop_body
              %v233 = vld [vmem:[%s231] sm:$0xff]
              %234 = vst [vmem:[%s232] sm:$0xff] %v233
              %v235 = vld [vmem:[%s231 + $0x8] sm:$0xff]
              %236 = vst [vmem:[%s232 + $0x8] sm:$0xff] %v235
            $region60: #{_lambda_.1} parent=54 // loop_footer
              %s230 = sadd.s32 1, %s226
            $region61: #{_lambda_.1} parent=54 // loop_footer_branch
              %225 = sbr.rel target = $region57
            $region62: #{_lambda_.1} parent=54 // loop_exit
              _
          $region55: #{_lambda_.1} parent=39 // pred_fallthru
            _
          %p237 = pneg %p221
          // Predicated region
          $region63: #{_lambda_.1} parent=39 // pred_check
            _
          $region64: #{_lambda_.1} parent=39 // pred_check_branch
            %239 = sbr.rel (%p221) target = $region66
          $region65: #{_lambda_.1} parent=39 // pred_region
            %s240 = sand.u32 16, 7
          $region66: #{_lambda_.1} parent=39 // pred_fallthru
            _
        $region40: #{_lambda_.1} parent=35 // pred_fallthru
          _
        // Predicated region
        $region41: #{_lambda_.1} parent=35 // pred_check
          %p205 = pneg %p201
        $region42: #{_lambda_.1} parent=35 // pred_check_branch
          %207 = sbr.rel (%p205) target = $region44
        $region43: #{_lambda_.1} parent=35 // pred_region
          %s208 = sshll.u32 1, 16
          %s209 = ssub.s32 %s208, 1
          loop: start=0, step=1, limit=1
          $region45: #{_lambda_.1} parent=43 // loop_pre_header
            _
          $region46: #{_lambda_.1} parent=43 // loop_header
            %s211 = sphi 0, %s215
            %p212 = scmp.ge.s32.totalorder %s211, 1
            %s216 = sphi %s199, %s199
            %s217 = sphi [#allocation2], [#allocation2]
          $region47: #{_lambda_.1} parent=43 // loop_header_branch
            %214 = sbr.rel (%p212) target = $region51
          $region48: #{_lambda_.1} parent=43 // loop_body
            %v218 = vld [vmem:[%s216] sm:%s209]
            %219 = vst [vmem:[%s217] sm:%s209] %v218
          $region49: #{_lambda_.1} parent=43 // loop_footer
            %s215 = sadd.s32 1, %s211
          $region50: #{_lambda_.1} parent=43 // loop_footer_branch
            %210 = sbr.rel target = $region46
          $region51: #{_lambda_.1} parent=43 // loop_exit
            _
        $region44: #{_lambda_.1} parent=35 // pred_fallthru
          _
        // Predicated region
        $region67: #{_lambda_.1} parent=35 // pred_check
          _
        $region68: #{_lambda_.1} parent=35 // pred_check_branch
          %243 = sbr.rel (0) target = $region70
        $region69: #{_lambda_.1} parent=35 // pred_region
          %244 = vsyncadd [#allocation5], 256
        $region70: #{_lambda_.1} parent=35 // pred_fallthru
          _
        %s245 = smul.u32 8, 1
        %s246 = smul.u32 %s245, 2
        %s247 = sshll.u32 %s246, 4
        %248 = dma.done [#allocation5], %s247
        %s249 = ssub.s32 %s193, 16
        %v250 = vlaneseq
        %v251 = vand.u32 %v250, 127
        %v252 = vadd.s32 %v251, 128
        %v253 = vstv %s249
        %v254 = vadd.s32 %v253, %v251
        %v255 = vadd.s32 %v253, %v252
        %vm256 = vcmp.lt.s32.totalorder %v254, 0
        %vm257 = vcmp.lt.s32.totalorder %v255, 0
        %vm258 = vcmp.ge.s32.totalorder %v254, 16
        %vm259 = vcmp.ge.s32.totalorder %v255, 16
        %vm260 = vcmp.ge.s32.totalorder %v254, 0
        %vm261 = vcmp.ge.s32.totalorder %v255, 0
        %vm262 = vcmp.lt.s32.totalorder %v254, 16
        %vm263 = vcmp.lt.s32.totalorder %v255, 16
        %vm264 = vmand %vm260, %vm262
        %vm265 = vmand %vm261, %vm263
        %v266 = vld [vmem:[#allocation2] sm:$0xff]
        %v267 = vld [vmem:[#allocation2 + $0x8] sm:$0xff]
        %v268 = vld [vmem:[%s3] sm:$0xff]
        %v269 = vld [vmem:[%s4] sm:$0xff]
        %v270 = vmul.f32 %v266, 0.8864196
        %v271 = vmul.f32 %v267, 0.8864196
        %272 = vrot.lane.b32.xlu0 %v266, 3
        %v273 = vpop.permute.xlu0 %272
        %274 = vrot.lane.b32.xlu0 %v267, 3
        %v275 = vpop.permute.xlu0 %274
        %vm276 = vcmp.lt.s32.totalorder %v251, 3
        %v277 = vsel %vm276, %v273, %v275
        %v278 = vsel %vm276, %v275, %v273
        %v279 = vmul.f32 %v278, 0.004057933
        %v280 = vmul.f32 %v277, 0.004057933
        %v281 = vadd.f32 %v270, %v279
        %v282 = vadd.f32 %v271, %v280
        %283 = vrot.lane.b32.xlu0 %v266, 2
        %v284 = vpop.permute.xlu0 %283
        %285 = vrot.lane.b32.xlu0 %v267, 2
        %v286 = vpop.permute.xlu0 %285
        %vm287 = vcmp.lt.s32.totalorder %v251, 2
        %v288 = vsel %vm287, %v284, %v286
        %v289 = vsel %vm287, %v286, %v284
        %v290 = vmul.f32 %v289, -0.05108693
        %v291 = vmul.f32 %v288, -0.05108693
        %v292 = vadd.f32 %v281, %v290
        %v293 = vadd.f32 %v282, %v291
        %v294 = vmul.f32 %v289, 0.018778928
        %v295 = vmul.f32 %v288, 0.018778928
        %v296 = vadd.f32 %v270, %v294
        %v297 = vadd.f32 %v271, %v295
        %298 = vrot.lane.b32.xlu0 %v266, 1
        %v299 = vpop.permute.xlu0 %298
        %300 = vrot.lane.b32.xlu0 %v267, 1
        %v301 = vpop.permute.xlu0 %300
        %vm302 = vcmp.lt.s32.totalorder %v251, 1
        %v303 = vsel %vm302, %v299, %v301
        %v304 = vsel %vm302, %v301, %v299
        %v305 = vmul.f32 %v304, 0.25714523
        %v306 = vmul.f32 %v303, 0.25714523
        %v307 = vadd.f32 %v292, %v305
        %v308 = vadd.f32 %v293, %v306
        %v309 = vmul.f32 %v304, -0.11531475
        %v310 = vmul.f32 %v303, -0.11531475
        %v311 = vadd.f32 %v296, %v309
        %v312 = vadd.f32 %v297, %v310
        %313 = vrot.lane.b32.xlu0 %v266, 127
        %v314 = vpop.permute.xlu0 %313
        %315 = vrot.lane.b32.xlu0 %v267, 127
        %v316 = vpop.permute.xlu0 %315
        %vm317 = vcmp.lt.s32.totalorder %v251, 127
        %v318 = vsel %vm317, %v314, %v316
        %v319 = vsel %vm317, %v316, %v314
        %v320 = vmul.f32 %v318, -0.11531475
        %v321 = vmul.f32 %v319, -0.11531475
        %v322 = vadd.f32 %v307, %v320
        %v323 = vadd.f32 %v308, %v321
        %v324 = vmul.f32 %v318, 0.25714523
        %v325 = vmul.f32 %v319, 0.25714523
        %v326 = vadd.f32 %v311, %v324
        %v327 = vadd.f32 %v312, %v325
        %328 = vrot.lane.b32.xlu0 %v266, 126
        %v329 = vpop.permute.xlu0 %328
        %330 = vrot.lane.b32.xlu0 %v267, 126
        %v331 = vpop.permute.xlu0 %330
        %vm332 = vcmp.lt.s32.totalorder %v251, 126
        %v333 = vsel %vm332, %v329, %v331
        %v334 = vsel %vm332, %v331, %v329
        %v335 = vmul.f32 %v333, 0.018778928
        %v336 = vmul.f32 %v334, 0.018778928
        %v337 = vadd.f32 %v322, %v335
        %v338 = vadd.f32 %v323, %v336
        %v339 = vmul.f32 %v333, -0.05108693
        %v340 = vmul.f32 %v334, -0.05108693
        %v341 = vadd.f32 %v326, %v339
        %v342 = vadd.f32 %v327, %v340
        %343 = vrot.lane.b32.xlu0 %v266, 125
        %v344 = vpop.permute.xlu0 %343
        %345 = vrot.lane.b32.xlu0 %v267, 125
        %v346 = vpop.permute.xlu0 %345
        %vm347 = vcmp.lt.s32.totalorder %v251, 125
        %v348 = vsel %vm347, %v344, %v346
        %v349 = vsel %vm347, %v346, %v344
        %v350 = vmul.f32 %v348, 0.004057933
        %v351 = vmul.f32 %v349, 0.004057933
        %v352 = vadd.f32 %v341, %v350
        %v353 = vadd.f32 %v342, %v351
        %355 = vset.pattern.permute.xlu0 0
        %356 = vperm.xlu0 %355, %v268
        %v357 = vpop.permute.xlu0 %356
        %v359 = vmul.f32 %v337, %v357
        %v360 = vmul.f32 %v338, %v357
        %v361 = vand.u32 2147483647, %v359
        %vm362 = vcmp.le.f32.partialorder %v361, 0.7853982
        %vm363 = vcmp.lt.s32.totalorder %v359, 0
        %v364 = vand.u32 %v359, 2139095040
        %v365 = vshrl.u32 %v364, 23
        %v366 = vsub.s32 %v365, 127
        %v367 = vand.u32 2147483647, %v359
        %v368 = vand.u32 %v367, 8388607
        %v369 = vor.u32 %v368, 8388608
        %v370 = vsub.s32 0, %v369
        %v371 = vadd.s32 %v366, 1
        %vm372 = vcmp.gt.s32.totalorder %v371, 0
        %v373 = vsel %vm372, %v371, 0
        %v374 = vshrl.u32 %v373, 5
        %v375 = vand.u32 %v373, 31
        %v376 = vsub.s32 32, %v375
        %v377 = vshrl.u32 683565275, %v376
        %v378 = vshll.u32 683565275, %v375
        %v379 = vshrl.u32 2475754826, %v376
        %v380 = vor.u32 %v378, %v379
        %v381 = vshll.u32 2475754826, %v375
        %v382 = vshrl.u32 2131351028, %v376
        %v383 = vor.u32 %v381, %v382
        %v384 = vshll.u32 2131351028, %v375
        %v385 = vshrl.u32 2102212464, %v376
        %v386 = vor.u32 %v384, %v385
        %v387 = vshll.u32 2102212464, %v375
        %v388 = vshrl.u32 920167782, %v376
        %v389 = vor.u32 %v387, %v388
        %v390 = vshll.u32 920167782, %v375
        %v391 = vshrl.u32 1326507024, %v376
        %v392 = vor.u32 %v390, %v391
        %vm393 = vcmp.lt.s32.totalorder %v374, 1
        %vm394 = vcmp.lt.s32.totalorder %v374, 2
        %vm395 = vcmp.lt.s32.totalorder %v374, 3
        %vm396 = vcmp.lt.s32.totalorder %v374, 4
        %v397 = vsel %vm393, %v377, %v380
        %v398 = vsel %vm396, %v386, 2102212464
        %v399 = vsel %vm395, %v383, %v398
        %v400 = vsel %vm394, %v397, %v399
        %v401 = vsel %vm393, %v380, %v383
        %v402 = vsel %vm396, %v389, 920167782
        %v403 = vsel %vm395, %v386, %v402
        %v404 = vsel %vm394, %v401, %v403
        %v405 = vsel %vm393, %v383, %v386
        %v406 = vsel %vm396, %v392, 1326507024
        %v407 = vsel %vm395, %v389, %v406
        %v408 = vsel %vm394, %v405, %v407
        %v409 = vshll.u32 %v369, 8
        %v410 = vmul.u32.u64.compose %v409, %v408
        %v411 = vextract.low.u32 %v410
        %v412 = vextract.high.u32 %v410
        %v413 = vmul.u32.u64.compose %v409, %v404
        %v414 = vextract.low.u32 %v413
        %v415 = vextract.high.u32 %v413
        %v416 = vmul.u32 %v409, %v400
        %v417 = vadd.s32 %v412, %v414
        %vm418 = vc.u32 %v412, %v414
        %v419 = vadd.s32 %v415, 1
        %v420 = vsel %vm418, %v419, %v415
        %v421 = vadd.s32 %v416, %v420
        %v422 = vadd.s32 %v421, 536870912
        %v423 = vshrl.u32 %v422, 30
        %v424 = vshll.u32 %v423, 30
        %v425 = vsub.s32 %v421, %v424
        %vm426 = vcmp.lt.s32.totalorder %v425, 0
        %v427 = vsub.s32 0, %v425
        %v428 = vsel %vm426, %v427, %v425
        %v429 = vclz %v428
        %v430 = vsub.s32 %v429, 2
        %vm431 = vcmp.gt.s32.totalorder 0, %v430
        %v432 = vsel %vm431, 0, %v430
        %v433 = vsub.s32 32, %v432
        %v434 = vshll.u32 %v425, %v432
        %v435 = vshrl.u32 %v417, %v433
        %v436 = vor.u32 %v434, %v435
        %v437 = vsub.s32 4294967266, %v432
        %v438 = vadd.s32 %v437, 127
        %v439 = vshll.u32 %v438, 23
        %v440 = vor.u32 4788187, %v439
        %v441 = vand.u32 2147483647, %v440
        %v443 = vcvt.s32.f32 %v436
        %v444 = vmul.f32 %v443, %v441
        %v445 = vxor.u32 %v444, 2147483648
        %v446 = vsel %vm363, %v445, %v444
        %v447 = vsub.s32 4, %v423
        %v448 = vsel %vm363, %v447, %v423
        %v449 = vsel %vm362, %v359, %v446
        %v450 = vsel %vm362, 0, %v448
        %v451 = vcosq.f32.pop %v449
        %v452 = vsinq.f32.pop %v449
        %vm453 = vweird.f32 %v359
        %v454 = vadd.s32 %v450, 3
        %v455 = vand.u32 %v454, 3
        %vm456 = vcmp.lt.s32.totalorder %v455, 2
        %vm457 = vcmp.eq.s32.totalorder %v455, 0
        %v458 = vxor.u32 %v452, 2147483648
        %v459 = vsel %vm457, %v451, %v458
        %vm460 = vcmp.eq.s32.totalorder %v455, 2
        %v461 = vxor.u32 %v451, 2147483648
        %v462 = vsel %vm460, %v461, %v452
        %v463 = vsel %vm456, %v459, %v462
        %v464 = vsel %vm453, nan, %v463
        %v465 = vand.u32 2147483647, %v360
        %vm466 = vcmp.le.f32.partialorder %v465, 0.7853982
        %vm467 = vcmp.lt.s32.totalorder %v360, 0
        %v468 = vand.u32 %v360, 2139095040
        %v469 = vshrl.u32 %v468, 23
        %v470 = vsub.s32 %v469, 127
        %v471 = vand.u32 2147483647, %v360
        %v472 = vand.u32 %v471, 8388607
        %v473 = vor.u32 %v472, 8388608
        %v474 = vsub.s32 0, %v473
        %v475 = vadd.s32 %v470, 1
        %vm476 = vcmp.gt.s32.totalorder %v475, 0
        %v477 = vsel %vm476, %v475, 0
        %v478 = vshrl.u32 %v477, 5
        %v479 = vand.u32 %v477, 31
        %v480 = vsub.s32 32, %v479
        %v481 = vshrl.u32 683565275, %v480
        %v482 = vshll.u32 683565275, %v479
        %v483 = vshrl.u32 2475754826, %v480
        %v484 = vor.u32 %v482, %v483
        %v485 = vshll.u32 2475754826, %v479
        %v486 = vshrl.u32 2131351028, %v480
        %v487 = vor.u32 %v485, %v486
        %v488 = vshll.u32 2131351028, %v479
        %v489 = vshrl.u32 2102212464, %v480
        %v490 = vor.u32 %v488, %v489
        %v491 = vshll.u32 2102212464, %v479
        %v492 = vshrl.u32 920167782, %v480
        %v493 = vor.u32 %v491, %v492
        %v494 = vshll.u32 920167782, %v479
        %v495 = vshrl.u32 1326507024, %v480
        %v496 = vor.u32 %v494, %v495
        %vm497 = vcmp.lt.s32.totalorder %v478, 1
        %vm498 = vcmp.lt.s32.totalorder %v478, 2
        %vm499 = vcmp.lt.s32.totalorder %v478, 3
        %vm500 = vcmp.lt.s32.totalorder %v478, 4
        %v501 = vsel %vm497, %v481, %v484
        %v502 = vsel %vm500, %v490, 2102212464
        %v503 = vsel %vm499, %v487, %v502
        %v504 = vsel %vm498, %v501, %v503
        %v505 = vsel %vm497, %v484, %v487
        %v506 = vsel %vm500, %v493, 920167782
        %v507 = vsel %vm499, %v490, %v506
        %v508 = vsel %vm498, %v505, %v507
        %v509 = vsel %vm497, %v487, %v490
        %v510 = vsel %vm500, %v496, 1326507024
        %v511 = vsel %vm499, %v493, %v510
        %v512 = vsel %vm498, %v509, %v511
        %v513 = vshll.u32 %v473, 8
        %v514 = vmul.u32.u64.compose %v513, %v512
        %v515 = vextract.low.u32 %v514
        %v516 = vextract.high.u32 %v514
        %v517 = vmul.u32.u64.compose %v513, %v508
        %v518 = vextract.low.u32 %v517
        %v519 = vextract.high.u32 %v517
        %v520 = vmul.u32 %v513, %v504
        %v521 = vadd.s32 %v516, %v518
        %vm522 = vc.u32 %v516, %v518
        %v523 = vadd.s32 %v519, 1
        %v524 = vsel %vm522, %v523, %v519
        %v525 = vadd.s32 %v520, %v524
        %v526 = vadd.s32 %v525, 536870912
        %v527 = vshrl.u32 %v526, 30
        %v528 = vshll.u32 %v527, 30
        %v529 = vsub.s32 %v525, %v528
        %vm530 = vcmp.lt.s32.totalorder %v529, 0
        %v531 = vsub.s32 0, %v529
        %v532 = vsel %vm530, %v531, %v529
        %v533 = vclz %v532
        %v534 = vsub.s32 %v533, 2
        %vm535 = vcmp.gt.s32.totalorder 0, %v534
        %v536 = vsel %vm535, 0, %v534
        %v537 = vsub.s32 32, %v536
        %v538 = vshll.u32 %v529, %v536
        %v539 = vshrl.u32 %v521, %v537
        %v540 = vor.u32 %v538, %v539
        %v541 = vsub.s32 4294967266, %v536
        %v542 = vadd.s32 %v541, 127
        %v543 = vshll.u32 %v542, 23
        %v544 = vor.u32 4788187, %v543
        %v545 = vand.u32 2147483647, %v544
        %v547 = vcvt.s32.f32 %v540
        %v548 = vmul.f32 %v547, %v545
        %v549 = vxor.u32 %v548, 2147483648
        %v550 = vsel %vm467, %v549, %v548
        %v551 = vsub.s32 4, %v527
        %v552 = vsel %vm467, %v551, %v527
        %v553 = vsel %vm466, %v360, %v550
        %v554 = vsel %vm466, 0, %v552
        %v555 = vcosq.f32.pop %v553
        %v556 = vsinq.f32.pop %v553
        %vm557 = vweird.f32 %v360
        %v558 = vadd.s32 %v554, 3
        %v559 = vand.u32 %v558, 3
        %vm560 = vcmp.lt.s32.totalorder %v559, 2
        %vm561 = vcmp.eq.s32.totalorder %v559, 0
        %v562 = vxor.u32 %v556, 2147483648
        %v563 = vsel %vm561, %v555, %v562
        %vm564 = vcmp.eq.s32.totalorder %v559, 2
        %v565 = vxor.u32 %v555, 2147483648
        %v566 = vsel %vm564, %v565, %v556
        %v567 = vsel %vm560, %v563, %v566
        %v568 = vsel %vm557, nan, %v567
        %v569 = vmul.f32 %v352, %v357
        %v570 = vmul.f32 %v353, %v357
        %v571 = vand.u32 2147483647, %v569
        %vm572 = vcmp.le.f32.partialorder %v571, 0.7853982
        %vm573 = vcmp.lt.s32.totalorder %v569, 0
        %v574 = vand.u32 %v569, 2139095040
        %v575 = vshrl.u32 %v574, 23
        %v576 = vsub.s32 %v575, 127
        %v577 = vand.u32 2147483647, %v569
        %v578 = vand.u32 %v577, 8388607
        %v579 = vor.u32 %v578, 8388608
        %v580 = vsub.s32 0, %v579
        %v581 = vadd.s32 %v576, 1
        %vm582 = vcmp.gt.s32.totalorder %v581, 0
        %v583 = vsel %vm582, %v581, 0
        %v584 = vshrl.u32 %v583, 5
        %v585 = vand.u32 %v583, 31
        %v586 = vsub.s32 32, %v585
        %v587 = vshrl.u32 683565275, %v586
        %v588 = vshll.u32 683565275, %v585
        %v589 = vshrl.u32 2475754826, %v586
        %v590 = vor.u32 %v588, %v589
        %v591 = vshll.u32 2475754826, %v585
        %v592 = vshrl.u32 2131351028, %v586
        %v593 = vor.u32 %v591, %v592
        %v594 = vshll.u32 2131351028, %v585
        %v595 = vshrl.u32 2102212464, %v586
        %v596 = vor.u32 %v594, %v595
        %v597 = vshll.u32 2102212464, %v585
        %v598 = vshrl.u32 920167782, %v586
        %v599 = vor.u32 %v597, %v598
        %v600 = vshll.u32 920167782, %v585
        %v601 = vshrl.u32 1326507024, %v586
        %v602 = vor.u32 %v600, %v601
        %vm603 = vcmp.lt.s32.totalorder %v584, 1
        %vm604 = vcmp.lt.s32.totalorder %v584, 2
        %vm605 = vcmp.lt.s32.totalorder %v584, 3
        %vm606 = vcmp.lt.s32.totalorder %v584, 4
        %v607 = vsel %vm603, %v587, %v590
        %v608 = vsel %vm606, %v596, 2102212464
        %v609 = vsel %vm605, %v593, %v608
        %v610 = vsel %vm604, %v607, %v609
        %v611 = vsel %vm603, %v590, %v593
        %v612 = vsel %vm606, %v599, 920167782
        %v613 = vsel %vm605, %v596, %v612
        %v614 = vsel %vm604, %v611, %v613
        %v615 = vsel %vm603, %v593, %v596
        %v616 = vsel %vm606, %v602, 1326507024
        %v617 = vsel %vm605, %v599, %v616
        %v618 = vsel %vm604, %v615, %v617
        %v619 = vshll.u32 %v579, 8
        %v620 = vmul.u32.u64.compose %v619, %v618
        %v621 = vextract.low.u32 %v620
        %v622 = vextract.high.u32 %v620
        %v623 = vmul.u32.u64.compose %v619, %v614
        %v624 = vextract.low.u32 %v623
        %v625 = vextract.high.u32 %v623
        %v626 = vmul.u32 %v619, %v610
        %v627 = vadd.s32 %v622, %v624
        %vm628 = vc.u32 %v622, %v624
        %v629 = vadd.s32 %v625, 1
        %v630 = vsel %vm628, %v629, %v625
        %v631 = vadd.s32 %v626, %v630
        %v632 = vadd.s32 %v631, 536870912
        %v633 = vshrl.u32 %v632, 30
        %v634 = vshll.u32 %v633, 30
        %v635 = vsub.s32 %v631, %v634
        %vm636 = vcmp.lt.s32.totalorder %v635, 0
        %v637 = vsub.s32 0, %v635
        %v638 = vsel %vm636, %v637, %v635
        %v639 = vclz %v638
        %v640 = vsub.s32 %v639, 2
        %vm641 = vcmp.gt.s32.totalorder 0, %v640
        %v642 = vsel %vm641, 0, %v640
        %v643 = vsub.s32 32, %v642
        %v644 = vshll.u32 %v635, %v642
        %v645 = vshrl.u32 %v627, %v643
        %v646 = vor.u32 %v644, %v645
        %v647 = vsub.s32 4294967266, %v642
        %v648 = vadd.s32 %v647, 127
        %v649 = vshll.u32 %v648, 23
        %v650 = vor.u32 4788187, %v649
        %v651 = vand.u32 2147483647, %v650
        %v653 = vcvt.s32.f32 %v646
        %v654 = vmul.f32 %v653, %v651
        %v655 = vxor.u32 %v654, 2147483648
        %v656 = vsel %vm573, %v655, %v654
        %v657 = vsub.s32 4, %v633
        %v658 = vsel %vm573, %v657, %v633
        %v659 = vsel %vm572, %v569, %v656
        %v660 = vsel %vm572, 0, %v658
        %v661 = vcosq.f32.pop %v659
        %v662 = vsinq.f32.pop %v659
        %vm663 = vweird.f32 %v569
        %v664 = vadd.s32 %v660, 3
        %v665 = vand.u32 %v664, 3
        %vm666 = vcmp.lt.s32.totalorder %v665, 2
        %vm667 = vcmp.eq.s32.totalorder %v665, 0
        %v668 = vxor.u32 %v662, 2147483648
        %v669 = vsel %vm667, %v661, %v668
        %vm670 = vcmp.eq.s32.totalorder %v665, 2
        %v671 = vxor.u32 %v661, 2147483648
        %v672 = vsel %vm670, %v671, %v662
        %v673 = vsel %vm666, %v669, %v672
        %v674 = vsel %vm663, nan, %v673
        %v675 = vand.u32 2147483647, %v570
        %vm676 = vcmp.le.f32.partialorder %v675, 0.7853982
        %vm677 = vcmp.lt.s32.totalorder %v570, 0
        %v678 = vand.u32 %v570, 2139095040
        %v679 = vshrl.u32 %v678, 23
        %v680 = vsub.s32 %v679, 127
        %v681 = vand.u32 2147483647, %v570
        %v682 = vand.u32 %v681, 8388607
        %v683 = vor.u32 %v682, 8388608
        %v684 = vsub.s32 0, %v683
        %v685 = vadd.s32 %v680, 1
        %vm686 = vcmp.gt.s32.totalorder %v685, 0
        %v687 = vsel %vm686, %v685, 0
        %v688 = vshrl.u32 %v687, 5
        %v689 = vand.u32 %v687, 31
        %v690 = vsub.s32 32, %v689
        %v691 = vshrl.u32 683565275, %v690
        %v692 = vshll.u32 683565275, %v689
        %v693 = vshrl.u32 2475754826, %v690
        %v694 = vor.u32 %v692, %v693
        %v695 = vshll.u32 2475754826, %v689
        %v696 = vshrl.u32 2131351028, %v690
        %v697 = vor.u32 %v695, %v696
        %v698 = vshll.u32 2131351028, %v689
        %v699 = vshrl.u32 2102212464, %v690
        %v700 = vor.u32 %v698, %v699
        %v701 = vshll.u32 2102212464, %v689
        %v702 = vshrl.u32 920167782, %v690
        %v703 = vor.u32 %v701, %v702
        %v704 = vshll.u32 920167782, %v689
        %v705 = vshrl.u32 1326507024, %v690
        %v706 = vor.u32 %v704, %v705
        %vm707 = vcmp.lt.s32.totalorder %v688, 1
        %vm708 = vcmp.lt.s32.totalorder %v688, 2
        %vm709 = vcmp.lt.s32.totalorder %v688, 3
        %vm710 = vcmp.lt.s32.totalorder %v688, 4
        %v711 = vsel %vm707, %v691, %v694
        %v712 = vsel %vm710, %v700, 2102212464
        %v713 = vsel %vm709, %v697, %v712
        %v714 = vsel %vm708, %v711, %v713
        %v715 = vsel %vm707, %v694, %v697
        %v716 = vsel %vm710, %v703, 920167782
        %v717 = vsel %vm709, %v700, %v716
        %v718 = vsel %vm708, %v715, %v717
        %v719 = vsel %vm707, %v697, %v700
        %v720 = vsel %vm710, %v706, 1326507024
        %v721 = vsel %vm709, %v703, %v720
        %v722 = vsel %vm708, %v719, %v721
        %v723 = vshll.u32 %v683, 8
        %v724 = vmul.u32.u64.compose %v723, %v722
        %v725 = vextract.low.u32 %v724
        %v726 = vextract.high.u32 %v724
        %v727 = vmul.u32.u64.compose %v723, %v718
        %v728 = vextract.low.u32 %v727
        %v729 = vextract.high.u32 %v727
        %v730 = vmul.u32 %v723, %v714
        %v731 = vadd.s32 %v726, %v728
        %vm732 = vc.u32 %v726, %v728
        %v733 = vadd.s32 %v729, 1
        %v734 = vsel %vm732, %v733, %v729
        %v735 = vadd.s32 %v730, %v734
        %v736 = vadd.s32 %v735, 536870912
        %v737 = vshrl.u32 %v736, 30
        %v738 = vshll.u32 %v737, 30
        %v739 = vsub.s32 %v735, %v738
        %vm740 = vcmp.lt.s32.totalorder %v739, 0
        %v741 = vsub.s32 0, %v739
        %v742 = vsel %vm740, %v741, %v739
        %v743 = vclz %v742
        %v744 = vsub.s32 %v743, 2
        %vm745 = vcmp.gt.s32.totalorder 0, %v744
        %v746 = vsel %vm745, 0, %v744
        %v747 = vsub.s32 32, %v746
        %v748 = vshll.u32 %v739, %v746
        %v749 = vshrl.u32 %v731, %v747
        %v750 = vor.u32 %v748, %v749
        %v751 = vsub.s32 4294967266, %v746
        %v752 = vadd.s32 %v751, 127
        %v753 = vshll.u32 %v752, 23
        %v754 = vor.u32 4788187, %v753
        %v755 = vand.u32 2147483647, %v754
        %v757 = vcvt.s32.f32 %v750
        %v758 = vmul.f32 %v757, %v755
        %v759 = vxor.u32 %v758, 2147483648
        %v760 = vsel %vm677, %v759, %v758
        %v761 = vsub.s32 4, %v737
        %v762 = vsel %vm677, %v761, %v737
        %v763 = vsel %vm676, %v570, %v760
        %v764 = vsel %vm676, 0, %v762
        %v765 = vcosq.f32.pop %v763
        %v766 = vsinq.f32.pop %v763
        %vm767 = vweird.f32 %v570
        %v768 = vadd.s32 %v764, 3
        %v769 = vand.u32 %v768, 3
        %vm770 = vcmp.lt.s32.totalorder %v769, 2
        %vm771 = vcmp.eq.s32.totalorder %v769, 0
        %v772 = vxor.u32 %v766, 2147483648
        %v773 = vsel %vm771, %v765, %v772
        %vm774 = vcmp.eq.s32.totalorder %v769, 2
        %v775 = vxor.u32 %v765, 2147483648
        %v776 = vsel %vm774, %v775, %v766
        %v777 = vsel %vm770, %v773, %v776
        %v778 = vsel %vm767, nan, %v777
        %780 = vset.pattern.permute.xlu0 0
        %781 = vperm.xlu0 %780, %v269
        %v782 = vpop.permute.xlu0 %781
        %v784 = vmul.f32 %v782, %v464
        %v785 = vmul.f32 %v782, %v568
        %v786 = vmul.f32 %v784, %v464
        %v787 = vmul.f32 %v785, %v568
        %v788 = vadd.f32 %v337, %v786
        %v789 = vadd.f32 %v338, %v787
        %v790 = vmul.f32 %v782, %v674
        %v791 = vmul.f32 %v782, %v778
        %v792 = vmul.f32 %v790, %v674
        %v793 = vmul.f32 %v791, %v778
        %v794 = vadd.f32 %v352, %v792
        %v795 = vadd.f32 %v353, %v793
        // Predicated region
        $region71: #{_lambda_.1} parent=35 // pred_check
          %p796 = pneg %p192
        $region72: #{_lambda_.1} parent=35 // pred_check_branch
          %798 = sbr.rel (%p796) target = $region74
        $region73: #{_lambda_.1} parent=35 // pred_region
          %vm799 = vcmp.eq.s32.totalorder %v254, 0
          %vm800 = vcmp.eq.s32.totalorder %v255, 0
          %v801 = vsel %vm799, 1, 0
          %v802 = vsel %vm800, 1, 0
          %vm803 = vcmp.eq.s32.totalorder %v801, 1
          %vm804 = vcmp.eq.s32.totalorder %v802, 1
          %v805 = vsel %vm803, %v788, 0.0
          %v806 = vsel %vm804, %v789, 0.0
          %v807 = vadd.f32 %v805, %v806
          %808 = vadd.xlane.f32.xlu0 %v807
          %v809 = vpop.xlane.xlu0 %808
          %vm810 = vcmask 7168
          %811 = vst.msk [vmem:[#allocation3] sm:$0xff] %vm810, %v809
          %vm812 = vcmp.eq.s32.totalorder %v254, 15
          %vm813 = vcmp.eq.s32.totalorder %v255, 15
          %v814 = vsel %vm812, 1, 0
          %v815 = vsel %vm813, 1, 0
          %vm816 = vcmp.eq.s32.totalorder %v814, 1
          %vm817 = vcmp.eq.s32.totalorder %v815, 1
          %v818 = vsel %vm816, %v794, 0.0
          %v819 = vsel %vm817, %v795, 0.0
          %v820 = vadd.f32 %v818, %v819
          %821 = vadd.xlane.f32.xlu0 %v820
          %v822 = vpop.xlane.xlu0 %821
          %823 = vst.msk [vmem:[#allocation4] sm:$0xff] %vm810, %v822
        $region74: #{_lambda_.1} parent=35 // pred_fallthru
          _
        %v824 = vld [vmem:[#allocation3] sm:$0xff]
        %v825 = vld [vmem:[#allocation4] sm:$0xff]
        %v826 = vsel %vm258, 1, 0
        %v827 = vsel %vm259, 1, 0
        %vm828 = vcmp.eq.s32.totalorder %v826, 1
        %vm829 = vcmp.eq.s32.totalorder %v827, 1
        %831 = vset.pattern.permute.xlu0 0
        %832 = vperm.xlu0 %831, %v825
        %v833 = vpop.permute.xlu0 %832
        %v835 = vsel %vm828, %v833, %v788
        %v836 = vsel %vm829, %v833, %v789
        %v837 = vsel %vm256, 1, 0
        %v838 = vsel %vm257, 1, 0
        %vm839 = vcmp.eq.s32.totalorder %v837, 1
        %vm840 = vcmp.eq.s32.totalorder %v838, 1
        %842 = vset.pattern.permute.xlu0 0
        %843 = vperm.xlu0 %842, %v824
        %v844 = vpop.permute.xlu0 %843
        %v846 = vsel %vm839, %v844, %v835
        %v847 = vsel %vm840, %v844, %v836
        %v848 = vsel %vm828, %v833, %v794
        %v849 = vsel %vm829, %v833, %v795
        %v850 = vsel %vm839, %v844, %v848
        %v851 = vsel %vm840, %v844, %v849
        %v852 = vmul.f32 %v846, 0.4432098
        %v853 = vmul.f32 %v847, 0.4432098
        %v854 = vmul.f32 %v850, 0.4432098
        %v855 = vmul.f32 %v851, 0.4432098
        %v856 = vadd.f32 %v852, %v854
        %v857 = vadd.f32 %v853, %v855
        %858 = vrot.lane.b32.xlu0 %v850, 3
        %v859 = vpop.permute.xlu0 %858
        %860 = vrot.lane.b32.xlu0 %v851, 3
        %v861 = vpop.permute.xlu0 %860
        %v862 = vsel %vm276, %v859, %v861
        %v863 = vsel %vm276, %v861, %v859
        %v864 = vmul.f32 %v863, 0.0020289666
        %v865 = vmul.f32 %v862, 0.0020289666
        %v866 = vadd.f32 %v856, %v864
        %v867 = vadd.f32 %v857, %v865
        %868 = vrot.lane.b32.xlu0 %v846, 2
        %v869 = vpop.permute.xlu0 %868
        %870 = vrot.lane.b32.xlu0 %v847, 2
        %v871 = vpop.permute.xlu0 %870
        %v872 = vsel %vm287, %v869, %v871
        %v873 = vsel %vm287, %v871, %v869
        %v874 = vmul.f32 %v873, 0.009389464
        %v875 = vmul.f32 %v872, 0.009389464
        %v876 = vadd.f32 %v866, %v874
        %v877 = vadd.f32 %v867, %v875
        %878 = vrot.lane.b32.xlu0 %v850, 2
        %v879 = vpop.permute.xlu0 %878
        %880 = vrot.lane.b32.xlu0 %v851, 2
        %v881 = vpop.permute.xlu0 %880
        %v882 = vsel %vm287, %v879, %v881
        %v883 = vsel %vm287, %v881, %v879
        %v884 = vmul.f32 %v883, -0.025543464
        %v885 = vmul.f32 %v882, -0.025543464
        %v886 = vadd.f32 %v876, %v884
        %v887 = vadd.f32 %v877, %v885
        %888 = vrot.lane.b32.xlu0 %v846, 1
        %v889 = vpop.permute.xlu0 %888
        %890 = vrot.lane.b32.xlu0 %v847, 1
        %v891 = vpop.permute.xlu0 %890
        %v892 = vsel %vm302, %v889, %v891
        %v893 = vsel %vm302, %v891, %v889
        %v894 = vmul.f32 %v893, -0.057657376
        %v895 = vmul.f32 %v892, -0.057657376
        %v896 = vadd.f32 %v886, %v894
        %v897 = vadd.f32 %v887, %v895
        %898 = vrot.lane.b32.xlu0 %v850, 1
        %v899 = vpop.permute.xlu0 %898
        %900 = vrot.lane.b32.xlu0 %v851, 1
        %v901 = vpop.permute.xlu0 %900
        %v902 = vsel %vm302, %v899, %v901
        %v903 = vsel %vm302, %v901, %v899
        %v904 = vmul.f32 %v903, 0.12857261
        %v905 = vmul.f32 %v902, 0.12857261
        %v906 = vadd.f32 %v896, %v904
        %v907 = vadd.f32 %v897, %v905
        %908 = vrot.lane.b32.xlu0 %v846, 127
        %v909 = vpop.permute.xlu0 %908
        %910 = vrot.lane.b32.xlu0 %v847, 127
        %v911 = vpop.permute.xlu0 %910
        %v912 = vsel %vm317, %v909, %v911
        %v913 = vsel %vm317, %v911, %v909
        %v914 = vmul.f32 %v912, 0.12857261
        %v915 = vmul.f32 %v913, 0.12857261
        %v916 = vadd.f32 %v906, %v914
        %v917 = vadd.f32 %v907, %v915
        %918 = vrot.lane.b32.xlu0 %v850, 127
        %v919 = vpop.permute.xlu0 %918
        %920 = vrot.lane.b32.xlu0 %v851, 127
        %v921 = vpop.permute.xlu0 %920
        %v922 = vsel %vm317, %v919, %v921
        %v923 = vsel %vm317, %v921, %v919
        %v924 = vmul.f32 %v922, -0.057657376
        %v925 = vmul.f32 %v923, -0.057657376
        %v926 = vadd.f32 %v916, %v924
        %v927 = vadd.f32 %v917, %v925
        %928 = vrot.lane.b32.xlu0 %v846, 126
        %v929 = vpop.permute.xlu0 %928
        %930 = vrot.lane.b32.xlu0 %v847, 126
        %v931 = vpop.permute.xlu0 %930
        %v932 = vsel %vm332, %v929, %v931
        %v933 = vsel %vm332, %v931, %v929
        %v934 = vmul.f32 %v932, -0.025543464
        %v935 = vmul.f32 %v933, -0.025543464
        %v936 = vadd.f32 %v926, %v934
        %v937 = vadd.f32 %v927, %v935
        %938 = vrot.lane.b32.xlu0 %v850, 126
        %v939 = vpop.permute.xlu0 %938
        %940 = vrot.lane.b32.xlu0 %v851, 126
        %v941 = vpop.permute.xlu0 %940
        %v942 = vsel %vm332, %v939, %v941
        %v943 = vsel %vm332, %v941, %v939
        %v944 = vmul.f32 %v942, 0.009389464
        %v945 = vmul.f32 %v943, 0.009389464
        %v946 = vadd.f32 %v936, %v944
        %v947 = vadd.f32 %v937, %v945
        %948 = vrot.lane.b32.xlu0 %v846, 125
        %v949 = vpop.permute.xlu0 %948
        %950 = vrot.lane.b32.xlu0 %v847, 125
        %v951 = vpop.permute.xlu0 %950
        %v952 = vsel %vm347, %v949, %v951
        %v953 = vsel %vm347, %v951, %v949
        %v954 = vmul.f32 %v952, 0.0020289666
        %v955 = vmul.f32 %v953, 0.0020289666
        %v956 = vadd.f32 %v946, %v954
        %v957 = vadd.f32 %v947, %v955
        %v958 = vsel %vm264, 1, 0
        %v959 = vsel %vm265, 1, 0
        %vm960 = vcmp.eq.s32.totalorder %v958, 1
        %vm961 = vcmp.eq.s32.totalorder %v959, 1
        %v962 = vsel %vm960, %v956, 0.0
        %v963 = vsel %vm961, %v957, 0.0
        %964 = vrot.lane.b32.xlu0 %v962, 1
        %v965 = vpop.permute.xlu0 %964
        %966 = vrot.lane.b32.xlu0 %v963, 1
        %v967 = vpop.permute.xlu0 %966
        %v968 = vsel %vm302, %v965, %v967
        %v969 = vsel %vm302, %v967, %v965
        %970 = vrot.lane.b32.xlu0 %v962, 127
        %v971 = vpop.permute.xlu0 %970
        %972 = vrot.lane.b32.xlu0 %v963, 127
        %v973 = vpop.permute.xlu0 %972
        %v974 = vsel %vm317, %v971, %v973
        %v975 = vsel %vm317, %v973, %v971
        %v976 = vpack.c.bf16 %v962, %v969
        %v977 = vpack.c.bf16 %v963, %v968
        %v978 = vpack.c.bf16 %v974, %v974
        %v979 = vpack.c.bf16 %v975, %v975
        %v980 = vld [vmem:[%s1] sm:$0xf]
        %v981 = vld [vmem:[%s2] sm:$0xff]
        %983 = vset.pattern.permute.xlu0 0
        %984 = vperm.xlu0 %983, %v981
        %v985 = vpop.permute.xlu0 %984
        %vm987 = vcmask 195584
        %v989 = vsel %vm987, %v980, 0
        %vm991 = vcmask 1043456
        %v993 = vsel %vm991, %v978, 0
        %v996 = vsel %vm991, %v979, 0
        %998 = vmatprep.subr.bf16.mxu0 0
        %999 = vmatpush1.bf16.msra.mxu0 0
        %1000 = vmatprep.subr.bf16.mxu0 0
        %1001 = vmatpush1.bf16.msra.mxu0 0
        %1002 = vmatprep.subr.bf16.mxu0 0
        %1003 = vmatpush1.bf16.msra.mxu0 0
        %1004 = vmatprep.subr.bf16.mxu0 0
        %1005 = vmatpush1.bf16.msra.mxu0 0
        %1006 = vmatprep.subr.bf16.mxu0 0
        %1007 = vmatpush1.bf16.msra.mxu0 0
        %1008 = vmatprep.subr.bf16.mxu0 0
        %1009 = vmatpush1.bf16.msra.mxu0 0
        %1010 = vmatprep.subr.bf16.mxu0 %v996
        %1011 = vmatpush1.bf16.msra.mxu0 %v993
        %1012 = vmatprep.subr.bf16.mxu0 %v977
        %1013 = vmatpush1.bf16.msra.mxu0 %v976
        %1014 = vmatprep.subr.bf16.mxu0 0
        %1015 = vmatpush2.bf16.msra.mxu0 0
        %1016 = vmatprep.subr.bf16.mxu0 0
        %1017 = vmatpush2.bf16.msra.mxu0 0
        %1018 = vmatprep.subr.bf16.mxu0 0
        %1019 = vmatpush2.bf16.msra.mxu0 0
        %1020 = vmatprep.subr.bf16.mxu0 0
        %1021 = vmatpush2.bf16.msra.mxu0 0
        %1022 = vmatprep.subr.bf16.mxu0 0
        %1023 = vmatpush2.bf16.msra.mxu0 0
        %1024 = vmatprep.subr.bf16.mxu0 0
        %1025 = vmatpush2.bf16.msra.mxu0 0
        %1026 = vmatprep.subr.bf16.mxu0 0
        %1027 = vmatpush2.bf16.msra.mxu0 0
        %1028 = vmatprep.subr.bf16.mxu0 0
        %1029 = vmatpush2.bf16.msra.mxu0 0
        %1030 = vmatprep.mubr.bf16.mxu0 0
        %1031 = vmatmul.mubr.bf16.gmra.mxu0 %v989
        %v1032 = vpop.f32.mrf.mxu0
        %v1033 = vadd.f32 %v985, %v1032
        %v1034 = vpop.f32.mrf.mxu0
        %v1035 = vadd.f32 %v985, %v1034
        %v1036 = vpop.f32.mrf.mxu0
        %v1037 = vpop.f32.mrf.mxu0
        %1038 = vdwg.mxu0
        %v1039 = vadd.f32 %v1033, %v266
        %v1040 = vadd.f32 %v1035, %v267
        %s1041 = scalar_lea.vmem %s3, 8
        %v1042 = vld [vmem:[%s1041] sm:$0xff]
        %s1043 = scalar_lea.vmem %s4, 8
        %v1044 = vld [vmem:[%s1043] sm:$0xff]
        // Predicated region
        $region75: #{_lambda_.1} parent=35 // pred_check
          %p1045 = pneg %p192
        $region76: #{_lambda_.1} parent=35 // pred_check_branch
          %1047 = sbr.rel (%p1045) target = $region78
        $region77: #{_lambda_.1} parent=35 // pred_region
          %vm1048 = vcmp.eq.s32.totalorder %v254, 0
          %vm1049 = vcmp.eq.s32.totalorder %v255, 0
          %v1050 = vsel %vm1048, 1, 0
          %v1051 = vsel %vm1049, 1, 0
          %vm1052 = vcmp.eq.s32.totalorder %v1050, 1
          %vm1053 = vcmp.eq.s32.totalorder %v1051, 1
          %v1054 = vsel %vm1052, %v1039, 0.0
          %v1055 = vsel %vm1053, %v1040, 0.0
          %v1056 = vadd.f32 %v1054, %v1055
          %1057 = vadd.xlane.f32.xlu0 %v1056
          %v1058 = vpop.xlane.xlu0 %1057
          %vm1059 = vcmask 7168
          %1060 = vst.msk [vmem:[#allocation3] sm:$0xff] %vm1059, %v1058
          %vm1061 = vcmp.eq.s32.totalorder %v254, 15
          %vm1062 = vcmp.eq.s32.totalorder %v255, 15
          %v1063 = vsel %vm1061, 1, 0
          %v1064 = vsel %vm1062, 1, 0
          %vm1065 = vcmp.eq.s32.totalorder %v1063, 1
          %vm1066 = vcmp.eq.s32.totalorder %v1064, 1
          %v1067 = vsel %vm1065, %v1039, 0.0
          %v1068 = vsel %vm1066, %v1040, 0.0
          %v1069 = vadd.f32 %v1067, %v1068
          %1070 = vadd.xlane.f32.xlu0 %v1069
          %v1071 = vpop.xlane.xlu0 %1070
          %1072 = vst.msk [vmem:[#allocation4] sm:$0xff] %vm1059, %v1071
        $region78: #{_lambda_.1} parent=35 // pred_fallthru
          _
        %v1073 = vld [vmem:[#allocation3] sm:$0xff]
        %v1074 = vld [vmem:[#allocation4] sm:$0xff]
        %1076 = vset.pattern.permute.xlu0 0
        %1077 = vperm.xlu0 %1076, %v1074
        %v1078 = vpop.permute.xlu0 %1077
        %v1080 = vsel %vm828, %v1078, %v1039
        %v1081 = vsel %vm829, %v1078, %v1040
        %1083 = vset.pattern.permute.xlu0 0
        %1084 = vperm.xlu0 %1083, %v1073
        %v1085 = vpop.permute.xlu0 %1084
        %v1087 = vsel %vm839, %v1085, %v1080
        %v1088 = vsel %vm840, %v1085, %v1081
        %v1089 = vmul.f32 %v1087, 0.8864196
        %v1090 = vmul.f32 %v1088, 0.8864196
        %1091 = vrot.lane.b32.xlu0 %v1087, 3
        %v1092 = vpop.permute.xlu0 %1091
        %1093 = vrot.lane.b32.xlu0 %v1088, 3
        %v1094 = vpop.permute.xlu0 %1093
        %v1095 = vsel %vm276, %v1092, %v1094
        %v1096 = vsel %vm276, %v1094, %v1092
        %v1097 = vmul.f32 %v1096, 0.004057933
        %v1098 = vmul.f32 %v1095, 0.004057933
        %v1099 = vadd.f32 %v1089, %v1097
        %v1100 = vadd.f32 %v1090, %v1098
        %1101 = vrot.lane.b32.xlu0 %v1087, 2
        %v1102 = vpop.permute.xlu0 %1101
        %1103 = vrot.lane.b32.xlu0 %v1088, 2
        %v1104 = vpop.permute.xlu0 %1103
        %v1105 = vsel %vm287, %v1102, %v1104
        %v1106 = vsel %vm287, %v1104, %v1102
        %v1107 = vmul.f32 %v1106, -0.05108693
        %v1108 = vmul.f32 %v1105, -0.05108693
        %v1109 = vadd.f32 %v1099, %v1107
        %v1110 = vadd.f32 %v1100, %v1108
        %v1111 = vmul.f32 %v1106, 0.018778928
        %v1112 = vmul.f32 %v1105, 0.018778928
        %v1113 = vadd.f32 %v1089, %v1111
        %v1114 = vadd.f32 %v1090, %v1112
        %1115 = vrot.lane.b32.xlu0 %v1087, 1
        %v1116 = vpop.permute.xlu0 %1115
        %1117 = vrot.lane.b32.xlu0 %v1088, 1
        %v1118 = vpop.permute.xlu0 %1117
        %v1119 = vsel %vm302, %v1116, %v1118
        %v1120 = vsel %vm302, %v1118, %v1116
        %v1121 = vmul.f32 %v1120, 0.25714523
        %v1122 = vmul.f32 %v1119, 0.25714523
        %v1123 = vadd.f32 %v1109, %v1121
        %v1124 = vadd.f32 %v1110, %v1122
        %v1125 = vmul.f32 %v1120, -0.11531475
        %v1126 = vmul.f32 %v1119, -0.11531475
        %v1127 = vadd.f32 %v1113, %v1125
        %v1128 = vadd.f32 %v1114, %v1126
        %1129 = vrot.lane.b32.xlu0 %v1087, 127
        %v1130 = vpop.permute.xlu0 %1129
        %1131 = vrot.lane.b32.xlu0 %v1088, 127
        %v1132 = vpop.permute.xlu0 %1131
        %v1133 = vsel %vm317, %v1130, %v1132
        %v1134 = vsel %vm317, %v1132, %v1130
        %v1135 = vmul.f32 %v1133, -0.11531475
        %v1136 = vmul.f32 %v1134, -0.11531475
        %v1137 = vadd.f32 %v1123, %v1135
        %v1138 = vadd.f32 %v1124, %v1136
        %v1139 = vmul.f32 %v1133, 0.25714523
        %v1140 = vmul.f32 %v1134, 0.25714523
        %v1141 = vadd.f32 %v1127, %v1139
        %v1142 = vadd.f32 %v1128, %v1140
        %1143 = vrot.lane.b32.xlu0 %v1087, 126
        %v1144 = vpop.permute.xlu0 %1143
        %1145 = vrot.lane.b32.xlu0 %v1088, 126
        %v1146 = vpop.permute.xlu0 %1145
        %v1147 = vsel %vm332, %v1144, %v1146
        %v1148 = vsel %vm332, %v1146, %v1144
        %v1149 = vmul.f32 %v1147, 0.018778928
        %v1150 = vmul.f32 %v1148, 0.018778928
        %v1151 = vadd.f32 %v1137, %v1149
        %v1152 = vadd.f32 %v1138, %v1150
        %v1153 = vmul.f32 %v1147, -0.05108693
        %v1154 = vmul.f32 %v1148, -0.05108693
        %v1155 = vadd.f32 %v1141, %v1153
        %v1156 = vadd.f32 %v1142, %v1154
        %1157 = vrot.lane.b32.xlu0 %v1087, 125
        %v1158 = vpop.permute.xlu0 %1157
        %1159 = vrot.lane.b32.xlu0 %v1088, 125
        %v1160 = vpop.permute.xlu0 %1159
        %v1161 = vsel %vm347, %v1158, %v1160
        %v1162 = vsel %vm347, %v1160, %v1158
        %v1163 = vmul.f32 %v1161, 0.004057933
        %v1164 = vmul.f32 %v1162, 0.004057933
        %v1165 = vadd.f32 %v1155, %v1163
        %v1166 = vadd.f32 %v1156, %v1164
        %1168 = vset.pattern.permute.xlu0 0
        %1169 = vperm.xlu0 %1168, %v1042
        %v1170 = vpop.permute.xlu0 %1169
        %v1172 = vmul.f32 %v1151, %v1170
        %v1173 = vmul.f32 %v1152, %v1170
        %v1174 = vand.u32 2147483647, %v1172
        %vm1175 = vcmp.le.f32.partialorder %v1174, 0.7853982
        %vm1176 = vcmp.lt.s32.totalorder %v1172, 0
        %v1177 = vand.u32 %v1172, 2139095040
        %v1178 = vshrl.u32 %v1177, 23
        %v1179 = vsub.s32 %v1178, 127
        %v1180 = vand.u32 2147483647, %v1172
        %v1181 = vand.u32 %v1180, 8388607
        %v1182 = vor.u32 %v1181, 8388608
        %v1183 = vsub.s32 0, %v1182
        %v1184 = vadd.s32 %v1179, 1
        %vm1185 = vcmp.gt.s32.totalorder %v1184, 0
        %v1186 = vsel %vm1185, %v1184, 0
        %v1187 = vshrl.u32 %v1186, 5
        %v1188 = vand.u32 %v1186, 31
        %v1189 = vsub.s32 32, %v1188
        %v1190 = vshrl.u32 683565275, %v1189
        %v1191 = vshll.u32 683565275, %v1188
        %v1192 = vshrl.u32 2475754826, %v1189
        %v1193 = vor.u32 %v1191, %v1192
        %v1194 = vshll.u32 2475754826, %v1188
        %v1195 = vshrl.u32 2131351028, %v1189
        %v1196 = vor.u32 %v1194, %v1195
        %v1197 = vshll.u32 2131351028, %v1188
        %v1198 = vshrl.u32 2102212464, %v1189
        %v1199 = vor.u32 %v1197, %v1198
        %v1200 = vshll.u32 2102212464, %v1188
        %v1201 = vshrl.u32 920167782, %v1189
        %v1202 = vor.u32 %v1200, %v1201
        %v1203 = vshll.u32 920167782, %v1188
        %v1204 = vshrl.u32 1326507024, %v1189
        %v1205 = vor.u32 %v1203, %v1204
        %vm1206 = vcmp.lt.s32.totalorder %v1187, 1
        %vm1207 = vcmp.lt.s32.totalorder %v1187, 2
        %vm1208 = vcmp.lt.s32.totalorder %v1187, 3
        %vm1209 = vcmp.lt.s32.totalorder %v1187, 4
        %v1210 = vsel %vm1206, %v1190, %v1193
        %v1211 = vsel %vm1209, %v1199, 2102212464
        %v1212 = vsel %vm1208, %v1196, %v1211
        %v1213 = vsel %vm1207, %v1210, %v1212
        %v1214 = vsel %vm1206, %v1193, %v1196
        %v1215 = vsel %vm1209, %v1202, 920167782
        %v1216 = vsel %vm1208, %v1199, %v1215
        %v1217 = vsel %vm1207, %v1214, %v1216
        %v1218 = vsel %vm1206, %v1196, %v1199
        %v1219 = vsel %vm1209, %v1205, 1326507024
        %v1220 = vsel %vm1208, %v1202, %v1219
        %v1221 = vsel %vm1207, %v1218, %v1220
        %v1222 = vshll.u32 %v1182, 8
        %v1223 = vmul.u32.u64.compose %v1222, %v1221
        %v1224 = vextract.low.u32 %v1223
        %v1225 = vextract.high.u32 %v1223
        %v1226 = vmul.u32.u64.compose %v1222, %v1217
        %v1227 = vextract.low.u32 %v1226
        %v1228 = vextract.high.u32 %v1226
        %v1229 = vmul.u32 %v1222, %v1213
        %v1230 = vadd.s32 %v1225, %v1227
        %vm1231 = vc.u32 %v1225, %v1227
        %v1232 = vadd.s32 %v1228, 1
        %v1233 = vsel %vm1231, %v1232, %v1228
        %v1234 = vadd.s32 %v1229, %v1233
        %v1235 = vadd.s32 %v1234, 536870912
        %v1236 = vshrl.u32 %v1235, 30
        %v1237 = vshll.u32 %v1236, 30
        %v1238 = vsub.s32 %v1234, %v1237
        %vm1239 = vcmp.lt.s32.totalorder %v1238, 0
        %v1240 = vsub.s32 0, %v1238
        %v1241 = vsel %vm1239, %v1240, %v1238
        %v1242 = vclz %v1241
        %v1243 = vsub.s32 %v1242, 2
        %vm1244 = vcmp.gt.s32.totalorder 0, %v1243
        %v1245 = vsel %vm1244, 0, %v1243
        %v1246 = vsub.s32 32, %v1245
        %v1247 = vshll.u32 %v1238, %v1245
        %v1248 = vshrl.u32 %v1230, %v1246
        %v1249 = vor.u32 %v1247, %v1248
        %v1250 = vsub.s32 4294967266, %v1245
        %v1251 = vadd.s32 %v1250, 127
        %v1252 = vshll.u32 %v1251, 23
        %v1253 = vor.u32 4788187, %v1252
        %v1254 = vand.u32 2147483647, %v1253
        %v1256 = vcvt.s32.f32 %v1249
        %v1257 = vmul.f32 %v1256, %v1254
        %v1258 = vxor.u32 %v1257, 2147483648
        %v1259 = vsel %vm1176, %v1258, %v1257
        %v1260 = vsub.s32 4, %v1236
        %v1261 = vsel %vm1176, %v1260, %v1236
        %v1262 = vsel %vm1175, %v1172, %v1259
        %v1263 = vsel %vm1175, 0, %v1261
        %v1264 = vcosq.f32.pop %v1262
        %v1265 = vsinq.f32.pop %v1262
        %vm1266 = vweird.f32 %v1172
        %v1267 = vadd.s32 %v1263, 3
        %v1268 = vand.u32 %v1267, 3
        %vm1269 = vcmp.lt.s32.totalorder %v1268, 2
        %vm1270 = vcmp.eq.s32.totalorder %v1268, 0
        %v1271 = vxor.u32 %v1265, 2147483648
        %v1272 = vsel %vm1270, %v1264, %v1271
        %vm1273 = vcmp.eq.s32.totalorder %v1268, 2
        %v1274 = vxor.u32 %v1264, 2147483648
        %v1275 = vsel %vm1273, %v1274, %v1265
        %v1276 = vsel %vm1269, %v1272, %v1275
        %v1277 = vsel %vm1266, nan, %v1276
        %v1278 = vand.u32 2147483647, %v1173
        %vm1279 = vcmp.le.f32.partialorder %v1278, 0.7853982
        %vm1280 = vcmp.lt.s32.totalorder %v1173, 0
        %v1281 = vand.u32 %v1173, 2139095040
        %v1282 = vshrl.u32 %v1281, 23
        %v1283 = vsub.s32 %v1282, 127
        %v1284 = vand.u32 2147483647, %v1173
        %v1285 = vand.u32 %v1284, 8388607
        %v1286 = vor.u32 %v1285, 8388608
        %v1287 = vsub.s32 0, %v1286
        %v1288 = vadd.s32 %v1283, 1
        %vm1289 = vcmp.gt.s32.totalorder %v1288, 0
        %v1290 = vsel %vm1289, %v1288, 0
        %v1291 = vshrl.u32 %v1290, 5
        %v1292 = vand.u32 %v1290, 31
        %v1293 = vsub.s32 32, %v1292
        %v1294 = vshrl.u32 683565275, %v1293
        %v1295 = vshll.u32 683565275, %v1292
        %v1296 = vshrl.u32 2475754826, %v1293
        %v1297 = vor.u32 %v1295, %v1296
        %v1298 = vshll.u32 2475754826, %v1292
        %v1299 = vshrl.u32 2131351028, %v1293
        %v1300 = vor.u32 %v1298, %v1299
        %v1301 = vshll.u32 2131351028, %v1292
        %v1302 = vshrl.u32 2102212464, %v1293
        %v1303 = vor.u32 %v1301, %v1302
        %v1304 = vshll.u32 2102212464, %v1292
        %v1305 = vshrl.u32 920167782, %v1293
        %v1306 = vor.u32 %v1304, %v1305
        %v1307 = vshll.u32 920167782, %v1292
        %v1308 = vshrl.u32 1326507024, %v1293
        %v1309 = vor.u32 %v1307, %v1308
        %vm1310 = vcmp.lt.s32.totalorder %v1291, 1
        %vm1311 = vcmp.lt.s32.totalorder %v1291, 2
        %vm1312 = vcmp.lt.s32.totalorder %v1291, 3
        %vm1313 = vcmp.lt.s32.totalorder %v1291, 4
        %v1314 = vsel %vm1310, %v1294, %v1297
        %v1315 = vsel %vm1313, %v1303, 2102212464
        %v1316 = vsel %vm1312, %v1300, %v1315
        %v1317 = vsel %vm1311, %v1314, %v1316
        %v1318 = vsel %vm1310, %v1297, %v1300
        %v1319 = vsel %vm1313, %v1306, 920167782
        %v1320 = vsel %vm1312, %v1303, %v1319
        %v1321 = vsel %vm1311, %v1318, %v1320
        %v1322 = vsel %vm1310, %v1300, %v1303
        %v1323 = vsel %vm1313, %v1309, 1326507024
        %v1324 = vsel %vm1312, %v1306, %v1323
        %v1325 = vsel %vm1311, %v1322, %v1324
        %v1326 = vshll.u32 %v1286, 8
        %v1327 = vmul.u32.u64.compose %v1326, %v1325
        %v1328 = vextract.low.u32 %v1327
        %v1329 = vextract.high.u32 %v1327
        %v1330 = vmul.u32.u64.compose %v1326, %v1321
        %v1331 = vextract.low.u32 %v1330
        %v1332 = vextract.high.u32 %v1330
        %v1333 = vmul.u32 %v1326, %v1317
        %v1334 = vadd.s32 %v1329, %v1331
        %vm1335 = vc.u32 %v1329, %v1331
        %v1336 = vadd.s32 %v1332, 1
        %v1337 = vsel %vm1335, %v1336, %v1332
        %v1338 = vadd.s32 %v1333, %v1337
        %v1339 = vadd.s32 %v1338, 536870912
        %v1340 = vshrl.u32 %v1339, 30
        %v1341 = vshll.u32 %v1340, 30
        %v1342 = vsub.s32 %v1338, %v1341
        %vm1343 = vcmp.lt.s32.totalorder %v1342, 0
        %v1344 = vsub.s32 0, %v1342
        %v1345 = vsel %vm1343, %v1344, %v1342
        %v1346 = vclz %v1345
        %v1347 = vsub.s32 %v1346, 2
        %vm1348 = vcmp.gt.s32.totalorder 0, %v1347
        %v1349 = vsel %vm1348, 0, %v1347
        %v1350 = vsub.s32 32, %v1349
        %v1351 = vshll.u32 %v1342, %v1349
        %v1352 = vshrl.u32 %v1334, %v1350
        %v1353 = vor.u32 %v1351, %v1352
        %v1354 = vsub.s32 4294967266, %v1349
        %v1355 = vadd.s32 %v1354, 127
        %v1356 = vshll.u32 %v1355, 23
        %v1357 = vor.u32 4788187, %v1356
        %v1358 = vand.u32 2147483647, %v1357
        %v1360 = vcvt.s32.f32 %v1353
        %v1361 = vmul.f32 %v1360, %v1358
        %v1362 = vxor.u32 %v1361, 2147483648
        %v1363 = vsel %vm1280, %v1362, %v1361
        %v1364 = vsub.s32 4, %v1340
        %v1365 = vsel %vm1280, %v1364, %v1340
        %v1366 = vsel %vm1279, %v1173, %v1363
        %v1367 = vsel %vm1279, 0, %v1365
        %v1368 = vcosq.f32.pop %v1366
        %v1369 = vsinq.f32.pop %v1366
        %vm1370 = vweird.f32 %v1173
        %v1371 = vadd.s32 %v1367, 3
        %v1372 = vand.u32 %v1371, 3
        %vm1373 = vcmp.lt.s32.totalorder %v1372, 2
        %vm1374 = vcmp.eq.s32.totalorder %v1372, 0
        %v1375 = vxor.u32 %v1369, 2147483648
        %v1376 = vsel %vm1374, %v1368, %v1375
        %vm1377 = vcmp.eq.s32.totalorder %v1372, 2
        %v1378 = vxor.u32 %v1368, 2147483648
        %v1379 = vsel %vm1377, %v1378, %v1369
        %v1380 = vsel %vm1373, %v1376, %v1379
        %v1381 = vsel %vm1370, nan, %v1380
        %v1382 = vmul.f32 %v1165, %v1170
        %v1383 = vmul.f32 %v1166, %v1170
        %v1384 = vand.u32 2147483647, %v1382
        %vm1385 = vcmp.le.f32.partialorder %v1384, 0.7853982
        %vm1386 = vcmp.lt.s32.totalorder %v1382, 0
        %v1387 = vand.u32 %v1382, 2139095040
        %v1388 = vshrl.u32 %v1387, 23
        %v1389 = vsub.s32 %v1388, 127
        %v1390 = vand.u32 2147483647, %v1382
        %v1391 = vand.u32 %v1390, 8388607
        %v1392 = vor.u32 %v1391, 8388608
        %v1393 = vsub.s32 0, %v1392
        %v1394 = vadd.s32 %v1389, 1
        %vm1395 = vcmp.gt.s32.totalorder %v1394, 0
        %v1396 = vsel %vm1395, %v1394, 0
        %v1397 = vshrl.u32 %v1396, 5
        %v1398 = vand.u32 %v1396, 31
        %v1399 = vsub.s32 32, %v1398
        %v1400 = vshrl.u32 683565275, %v1399
        %v1401 = vshll.u32 683565275, %v1398
        %v1402 = vshrl.u32 2475754826, %v1399
        %v1403 = vor.u32 %v1401, %v1402
        %v1404 = vshll.u32 2475754826, %v1398
        %v1405 = vshrl.u32 2131351028, %v1399
        %v1406 = vor.u32 %v1404, %v1405
        %v1407 = vshll.u32 2131351028, %v1398
        %v1408 = vshrl.u32 2102212464, %v1399
        %v1409 = vor.u32 %v1407, %v1408
        %v1410 = vshll.u32 2102212464, %v1398
        %v1411 = vshrl.u32 920167782, %v1399
        %v1412 = vor.u32 %v1410, %v1411
        %v1413 = vshll.u32 920167782, %v1398
        %v1414 = vshrl.u32 1326507024, %v1399
        %v1415 = vor.u32 %v1413, %v1414
        %vm1416 = vcmp.lt.s32.totalorder %v1397, 1
        %vm1417 = vcmp.lt.s32.totalorder %v1397, 2
        %vm1418 = vcmp.lt.s32.totalorder %v1397, 3
        %vm1419 = vcmp.lt.s32.totalorder %v1397, 4
        %v1420 = vsel %vm1416, %v1400, %v1403
        %v1421 = vsel %vm1419, %v1409, 2102212464
        %v1422 = vsel %vm1418, %v1406, %v1421
        %v1423 = vsel %vm1417, %v1420, %v1422
        %v1424 = vsel %vm1416, %v1403, %v1406
        %v1425 = vsel %vm1419, %v1412, 920167782
        %v1426 = vsel %vm1418, %v1409, %v1425
        %v1427 = vsel %vm1417, %v1424, %v1426
        %v1428 = vsel %vm1416, %v1406, %v1409
        %v1429 = vsel %vm1419, %v1415, 1326507024
        %v1430 = vsel %vm1418, %v1412, %v1429
        %v1431 = vsel %vm1417, %v1428, %v1430
        %v1432 = vshll.u32 %v1392, 8
        %v1433 = vmul.u32.u64.compose %v1432, %v1431
        %v1434 = vextract.low.u32 %v1433
        %v1435 = vextract.high.u32 %v1433
        %v1436 = vmul.u32.u64.compose %v1432, %v1427
        %v1437 = vextract.low.u32 %v1436
        %v1438 = vextract.high.u32 %v1436
        %v1439 = vmul.u32 %v1432, %v1423
        %v1440 = vadd.s32 %v1435, %v1437
        %vm1441 = vc.u32 %v1435, %v1437
        %v1442 = vadd.s32 %v1438, 1
        %v1443 = vsel %vm1441, %v1442, %v1438
        %v1444 = vadd.s32 %v1439, %v1443
        %v1445 = vadd.s32 %v1444, 536870912
        %v1446 = vshrl.u32 %v1445, 30
        %v1447 = vshll.u32 %v1446, 30
        %v1448 = vsub.s32 %v1444, %v1447
        %vm1449 = vcmp.lt.s32.totalorder %v1448, 0
        %v1450 = vsub.s32 0, %v1448
        %v1451 = vsel %vm1449, %v1450, %v1448
        %v1452 = vclz %v1451
        %v1453 = vsub.s32 %v1452, 2
        %vm1454 = vcmp.gt.s32.totalorder 0, %v1453
        %v1455 = vsel %vm1454, 0, %v1453
        %v1456 = vsub.s32 32, %v1455
        %v1457 = vshll.u32 %v1448, %v1455
        %v1458 = vshrl.u32 %v1440, %v1456
        %v1459 = vor.u32 %v1457, %v1458
        %v1460 = vsub.s32 4294967266, %v1455
        %v1461 = vadd.s32 %v1460, 127
        %v1462 = vshll.u32 %v1461, 23
        %v1463 = vor.u32 4788187, %v1462
        %v1464 = vand.u32 2147483647, %v1463
        %v1466 = vcvt.s32.f32 %v1459
        %v1467 = vmul.f32 %v1466, %v1464
        %v1468 = vxor.u32 %v1467, 2147483648
        %v1469 = vsel %vm1386, %v1468, %v1467
        %v1470 = vsub.s32 4, %v1446
        %v1471 = vsel %vm1386, %v1470, %v1446
        %v1472 = vsel %vm1385, %v1382, %v1469
        %v1473 = vsel %vm1385, 0, %v1471
        %v1474 = vcosq.f32.pop %v1472
        %v1475 = vsinq.f32.pop %v1472
        %vm1476 = vweird.f32 %v1382
        %v1477 = vadd.s32 %v1473, 3
        %v1478 = vand.u32 %v1477, 3
        %vm1479 = vcmp.lt.s32.totalorder %v1478, 2
        %vm1480 = vcmp.eq.s32.totalorder %v1478, 0
        %v1481 = vxor.u32 %v1475, 2147483648
        %v1482 = vsel %vm1480, %v1474, %v1481
        %vm1483 = vcmp.eq.s32.totalorder %v1478, 2
        %v1484 = vxor.u32 %v1474, 2147483648
        %v1485 = vsel %vm1483, %v1484, %v1475
        %v1486 = vsel %vm1479, %v1482, %v1485
        %v1487 = vsel %vm1476, nan, %v1486
        %v1488 = vand.u32 2147483647, %v1383
        %vm1489 = vcmp.le.f32.partialorder %v1488, 0.7853982
        %vm1490 = vcmp.lt.s32.totalorder %v1383, 0
        %v1491 = vand.u32 %v1383, 2139095040
        %v1492 = vshrl.u32 %v1491, 23
        %v1493 = vsub.s32 %v1492, 127
        %v1494 = vand.u32 2147483647, %v1383
        %v1495 = vand.u32 %v1494, 8388607
        %v1496 = vor.u32 %v1495, 8388608
        %v1497 = vsub.s32 0, %v1496
        %v1498 = vadd.s32 %v1493, 1
        %vm1499 = vcmp.gt.s32.totalorder %v1498, 0
        %v1500 = vsel %vm1499, %v1498, 0
        %v1501 = vshrl.u32 %v1500, 5
        %v1502 = vand.u32 %v1500, 31
        %v1503 = vsub.s32 32, %v1502
        %v1504 = vshrl.u32 683565275, %v1503
        %v1505 = vshll.u32 683565275, %v1502
        %v1506 = vshrl.u32 2475754826, %v1503
        %v1507 = vor.u32 %v1505, %v1506
        %v1508 = vshll.u32 2475754826, %v1502
        %v1509 = vshrl.u32 2131351028, %v1503
        %v1510 = vor.u32 %v1508, %v1509
        %v1511 = vshll.u32 2131351028, %v1502
        %v1512 = vshrl.u32 2102212464, %v1503
        %v1513 = vor.u32 %v1511, %v1512
        %v1514 = vshll.u32 2102212464, %v1502
        %v1515 = vshrl.u32 920167782, %v1503
        %v1516 = vor.u32 %v1514, %v1515
        %v1517 = vshll.u32 920167782, %v1502
        %v1518 = vshrl.u32 1326507024, %v1503
        %v1519 = vor.u32 %v1517, %v1518
        %vm1520 = vcmp.lt.s32.totalorder %v1501, 1
        %vm1521 = vcmp.lt.s32.totalorder %v1501, 2
        %vm1522 = vcmp.lt.s32.totalorder %v1501, 3
        %vm1523 = vcmp.lt.s32.totalorder %v1501, 4
        %v1524 = vsel %vm1520, %v1504, %v1507
        %v1525 = vsel %vm1523, %v1513, 2102212464
        %v1526 = vsel %vm1522, %v1510, %v1525
        %v1527 = vsel %vm1521, %v1524, %v1526
        %v1528 = vsel %vm1520, %v1507, %v1510
        %v1529 = vsel %vm1523, %v1516, 920167782
        %v1530 = vsel %vm1522, %v1513, %v1529
        %v1531 = vsel %vm1521, %v1528, %v1530
        %v1532 = vsel %vm1520, %v1510, %v1513
        %v1533 = vsel %vm1523, %v1519, 1326507024
        %v1534 = vsel %vm1522, %v1516, %v1533
        %v1535 = vsel %vm1521, %v1532, %v1534
        %v1536 = vshll.u32 %v1496, 8
        %v1537 = vmul.u32.u64.compose %v1536, %v1535
        %v1538 = vextract.low.u32 %v1537
        %v1539 = vextract.high.u32 %v1537
        %v1540 = vmul.u32.u64.compose %v1536, %v1531
        %v1541 = vextract.low.u32 %v1540
        %v1542 = vextract.high.u32 %v1540
        %v1543 = vmul.u32 %v1536, %v1527
        %v1544 = vadd.s32 %v1539, %v1541
        %vm1545 = vc.u32 %v1539, %v1541
        %v1546 = vadd.s32 %v1542, 1
        %v1547 = vsel %vm1545, %v1546, %v1542
        %v1548 = vadd.s32 %v1543, %v1547
        %v1549 = vadd.s32 %v1548, 536870912
        %v1550 = vshrl.u32 %v1549, 30
        %v1551 = vshll.u32 %v1550, 30
        %v1552 = vsub.s32 %v1548, %v1551
        %vm1553 = vcmp.lt.s32.totalorder %v1552, 0
        %v1554 = vsub.s32 0, %v1552
        %v1555 = vsel %vm1553, %v1554, %v1552
        %v1556 = vclz %v1555
        %v1557 = vsub.s32 %v1556, 2
        %vm1558 = vcmp.gt.s32.totalorder 0, %v1557
        %v1559 = vsel %vm1558, 0, %v1557
        %v1560 = vsub.s32 32, %v1559
        %v1561 = vshll.u32 %v1552, %v1559
        %v1562 = vshrl.u32 %v1544, %v1560
        %v1563 = vor.u32 %v1561, %v1562
        %v1564 = vsub.s32 4294967266, %v1559
        %v1565 = vadd.s32 %v1564, 127
        %v1566 = vshll.u32 %v1565, 23
        %v1567 = vor.u32 4788187, %v1566
        %v1568 = vand.u32 2147483647, %v1567
        %v1570 = vcvt.s32.f32 %v1563
        %v1571 = vmul.f32 %v1570, %v1568
        %v1572 = vxor.u32 %v1571, 2147483648
        %v1573 = vsel %vm1490, %v1572, %v1571
        %v1574 = vsub.s32 4, %v1550
        %v1575 = vsel %vm1490, %v1574, %v1550
        %v1576 = vsel %vm1489, %v1383, %v1573
        %v1577 = vsel %vm1489, 0, %v1575
        %v1578 = vcosq.f32.pop %v1576
        %v1579 = vsinq.f32.pop %v1576
        %vm1580 = vweird.f32 %v1383
        %v1581 = vadd.s32 %v1577, 3
        %v1582 = vand.u32 %v1581, 3
        %vm1583 = vcmp.lt.s32.totalorder %v1582, 2
        %vm1584 = vcmp.eq.s32.totalorder %v1582, 0
        %v1585 = vxor.u32 %v1579, 2147483648
        %v1586 = vsel %vm1584, %v1578, %v1585
        %vm1587 = vcmp.eq.s32.totalorder %v1582, 2
        %v1588 = vxor.u32 %v1578, 2147483648
        %v1589 = vsel %vm1587, %v1588, %v1579
        %v1590 = vsel %vm1583, %v1586, %v1589
        %v1591 = vsel %vm1580, nan, %v1590
        %1593 = vset.pattern.permute.xlu0 0
        %1594 = vperm.xlu0 %1593, %v1044
        %v1595 = vpop.permute.xlu0 %1594
        %v1597 = vmul.f32 %v1595, %v1277
        %v1598 = vmul.f32 %v1595, %v1381
        %v1599 = vmul.f32 %v1597, %v1277
        %v1600 = vmul.f32 %v1598, %v1381
        %v1601 = vadd.f32 %v1151, %v1599
        %v1602 = vadd.f32 %v1152, %v1600
        %v1603 = vmul.f32 %v1595, %v1487
        %v1604 = vmul.f32 %v1595, %v1591
        %v1605 = vmul.f32 %v1603, %v1487
        %v1606 = vmul.f32 %v1604, %v1591
        %v1607 = vadd.f32 %v1165, %v1605
        %v1608 = vadd.f32 %v1166, %v1606
        // Predicated region
        $region79: #{_lambda_.1} parent=35 // pred_check
          %p1609 = pneg %p192
        $region80: #{_lambda_.1} parent=35 // pred_check_branch
          %1611 = sbr.rel (%p1609) target = $region82
        $region81: #{_lambda_.1} parent=35 // pred_region
          %vm1612 = vcmp.eq.s32.totalorder %v254, 0
          %vm1613 = vcmp.eq.s32.totalorder %v255, 0
          %v1614 = vsel %vm1612, 1, 0
          %v1615 = vsel %vm1613, 1, 0
          %vm1616 = vcmp.eq.s32.totalorder %v1614, 1
          %vm1617 = vcmp.eq.s32.totalorder %v1615, 1
          %v1618 = vsel %vm1616, %v1601, 0.0
          %v1619 = vsel %vm1617, %v1602, 0.0
          %v1620 = vadd.f32 %v1618, %v1619
          %1621 = vadd.xlane.f32.xlu0 %v1620
          %v1622 = vpop.xlane.xlu0 %1621
          %vm1623 = vcmask 7168
          %1624 = vst.msk [vmem:[#allocation3] sm:$0xff] %vm1623, %v1622
          %vm1625 = vcmp.eq.s32.totalorder %v254, 15
          %vm1626 = vcmp.eq.s32.totalorder %v255, 15
          %v1627 = vsel %vm1625, 1, 0
          %v1628 = vsel %vm1626, 1, 0
          %vm1629 = vcmp.eq.s32.totalorder %v1627, 1
          %vm1630 = vcmp.eq.s32.totalorder %v1628, 1
          %v1631 = vsel %vm1629, %v1607, 0.0
          %v1632 = vsel %vm1630, %v1608, 0.0
          %v1633 = vadd.f32 %v1631, %v1632
          %1634 = vadd.xlane.f32.xlu0 %v1633
          %v1635 = vpop.xlane.xlu0 %1634
          %1636 = vst.msk [vmem:[#allocation4] sm:$0xff] %vm1623, %v1635
        $region82: #{_lambda_.1} parent=35 // pred_fallthru
          _
        %v1637 = vld [vmem:[#allocation3] sm:$0xff]
        %v1638 = vld [vmem:[#allocation4] sm:$0xff]
        %1640 = vset.pattern.permute.xlu0 0
        %1641 = vperm.xlu0 %1640, %v1638
        %v1642 = vpop.permute.xlu0 %1641
        %v1644 = vsel %vm828, %v1642, %v1601
        %v1645 = vsel %vm829, %v1642, %v1602
        %1647 = vset.pattern.permute.xlu0 0
        %1648 = vperm.xlu0 %1647, %v1637
        %v1649 = vpop.permute.xlu0 %1648
        %v1651 = vsel %vm839, %v1649, %v1644
        %v1652 = vsel %vm840, %v1649, %v1645
        %v1653 = vsel %vm828, %v1642, %v1607
        %v1654 = vsel %vm829, %v1642, %v1608
        %v1655 = vsel %vm839, %v1649, %v1653
        %v1656 = vsel %vm840, %v1649, %v1654
        %v1657 = vmul.f32 %v1651, 0.4432098
        %v1658 = vmul.f32 %v1652, 0.4432098
        %v1659 = vmul.f32 %v1655, 0.4432098
        %v1660 = vmul.f32 %v1656, 0.4432098
        %v1661 = vadd.f32 %v1657, %v1659
        %v1662 = vadd.f32 %v1658, %v1660
        %1663 = vrot.lane.b32.xlu0 %v1655, 3
        %v1664 = vpop.permute.xlu0 %1663
        %1665 = vrot.lane.b32.xlu0 %v1656, 3
        %v1666 = vpop.permute.xlu0 %1665
        %v1667 = vsel %vm276, %v1664, %v1666
        %v1668 = vsel %vm276, %v1666, %v1664
        %v1669 = vmul.f32 %v1668, 0.0020289666
        %v1670 = vmul.f32 %v1667, 0.0020289666
        %v1671 = vadd.f32 %v1661, %v1669
        %v1672 = vadd.f32 %v1662, %v1670
        %1673 = vrot.lane.b32.xlu0 %v1651, 2
        %v1674 = vpop.permute.xlu0 %1673
        %1675 = vrot.lane.b32.xlu0 %v1652, 2
        %v1676 = vpop.permute.xlu0 %1675
        %v1677 = vsel %vm287, %v1674, %v1676
        %v1678 = vsel %vm287, %v1676, %v1674
        %v1679 = vmul.f32 %v1678, 0.009389464
        %v1680 = vmul.f32 %v1677, 0.009389464
        %v1681 = vadd.f32 %v1671, %v1679
        %v1682 = vadd.f32 %v1672, %v1680
        %1683 = vrot.lane.b32.xlu0 %v1655, 2
        %v1684 = vpop.permute.xlu0 %1683
        %1685 = vrot.lane.b32.xlu0 %v1656, 2
        %v1686 = vpop.permute.xlu0 %1685
        %v1687 = vsel %vm287, %v1684, %v1686
        %v1688 = vsel %vm287, %v1686, %v1684
        %v1689 = vmul.f32 %v1688, -0.025543464
        %v1690 = vmul.f32 %v1687, -0.025543464
        %v1691 = vadd.f32 %v1681, %v1689
        %v1692 = vadd.f32 %v1682, %v1690
        %1693 = vrot.lane.b32.xlu0 %v1651, 1
        %v1694 = vpop.permute.xlu0 %1693
        %1695 = vrot.lane.b32.xlu0 %v1652, 1
        %v1696 = vpop.permute.xlu0 %1695
        %v1697 = vsel %vm302, %v1694, %v1696
        %v1698 = vsel %vm302, %v1696, %v1694
        %v1699 = vmul.f32 %v1698, -0.057657376
        %v1700 = vmul.f32 %v1697, -0.057657376
        %v1701 = vadd.f32 %v1691, %v1699
        %v1702 = vadd.f32 %v1692, %v1700
        %1703 = vrot.lane.b32.xlu0 %v1655, 1
        %v1704 = vpop.permute.xlu0 %1703
        %1705 = vrot.lane.b32.xlu0 %v1656, 1
        %v1706 = vpop.permute.xlu0 %1705
        %v1707 = vsel %vm302, %v1704, %v1706
        %v1708 = vsel %vm302, %v1706, %v1704
        %v1709 = vmul.f32 %v1708, 0.12857261
        %v1710 = vmul.f32 %v1707, 0.12857261
        %v1711 = vadd.f32 %v1701, %v1709
        %v1712 = vadd.f32 %v1702, %v1710
        %1713 = vrot.lane.b32.xlu0 %v1651, 127
        %v1714 = vpop.permute.xlu0 %1713
        %1715 = vrot.lane.b32.xlu0 %v1652, 127
        %v1716 = vpop.permute.xlu0 %1715
        %v1717 = vsel %vm317, %v1714, %v1716
        %v1718 = vsel %vm317, %v1716, %v1714
        %v1719 = vmul.f32 %v1717, 0.12857261
        %v1720 = vmul.f32 %v1718, 0.12857261
        %v1721 = vadd.f32 %v1711, %v1719
        %v1722 = vadd.f32 %v1712, %v1720
        %1723 = vrot.lane.b32.xlu0 %v1655, 127
        %v1724 = vpop.permute.xlu0 %1723
        %1725 = vrot.lane.b32.xlu0 %v1656, 127
        %v1726 = vpop.permute.xlu0 %1725
        %v1727 = vsel %vm317, %v1724, %v1726
        %v1728 = vsel %vm317, %v1726, %v1724
        %v1729 = vmul.f32 %v1727, -0.057657376
        %v1730 = vmul.f32 %v1728, -0.057657376
        %v1731 = vadd.f32 %v1721, %v1729
        %v1732 = vadd.f32 %v1722, %v1730
        %1733 = vrot.lane.b32.xlu0 %v1651, 126
        %v1734 = vpop.permute.xlu0 %1733
        %1735 = vrot.lane.b32.xlu0 %v1652, 126
        %v1736 = vpop.permute.xlu0 %1735
        %v1737 = vsel %vm332, %v1734, %v1736
        %v1738 = vsel %vm332, %v1736, %v1734
        %v1739 = vmul.f32 %v1737, -0.025543464
        %v1740 = vmul.f32 %v1738, -0.025543464
        %v1741 = vadd.f32 %v1731, %v1739
        %v1742 = vadd.f32 %v1732, %v1740
        %1743 = vrot.lane.b32.xlu0 %v1655, 126
        %v1744 = vpop.permute.xlu0 %1743
        %1745 = vrot.lane.b32.xlu0 %v1656, 126
        %v1746 = vpop.permute.xlu0 %1745
        %v1747 = vsel %vm332, %v1744, %v1746
        %v1748 = vsel %vm332, %v1746, %v1744
        %v1749 = vmul.f32 %v1747, 0.009389464
        %v1750 = vmul.f32 %v1748, 0.009389464
        %v1751 = vadd.f32 %v1741, %v1749
        %v1752 = vadd.f32 %v1742, %v1750
        %1753 = vrot.lane.b32.xlu0 %v1651, 125
        %v1754 = vpop.permute.xlu0 %1753
        %1755 = vrot.lane.b32.xlu0 %v1652, 125
        %v1756 = vpop.permute.xlu0 %1755
        %v1757 = vsel %vm347, %v1754, %v1756
        %v1758 = vsel %vm347, %v1756, %v1754
        %v1759 = vmul.f32 %v1757, 0.0020289666
        %v1760 = vmul.f32 %v1758, 0.0020289666
        %v1761 = vadd.f32 %v1751, %v1759
        %v1762 = vadd.f32 %v1752, %v1760
        %v1763 = vsel %vm960, %v1761, 0.0
        %v1764 = vsel %vm961, %v1762, 0.0
        %1765 = vrot.lane.b32.xlu0 %v1763, 3
        %v1766 = vpop.permute.xlu0 %1765
        %1767 = vrot.lane.b32.xlu0 %v1764, 3
        %v1768 = vpop.permute.xlu0 %1767
        %v1769 = vsel %vm276, %v1766, %v1768
        %v1770 = vsel %vm276, %v1768, %v1766
        %1771 = vrot.lane.b32.xlu0 %v1763, 125
        %v1772 = vpop.permute.xlu0 %1771
        %1773 = vrot.lane.b32.xlu0 %v1764, 125
        %v1774 = vpop.permute.xlu0 %1773
        %v1775 = vsel %vm347, %v1772, %v1774
        %v1776 = vsel %vm347, %v1774, %v1772
        %v1777 = vpack.c.bf16 %v1763, %v1770
        %v1778 = vpack.c.bf16 %v1764, %v1769
        %v1779 = vpack.c.bf16 %v1775, %v1775
        %v1780 = vpack.c.bf16 %v1776, %v1776
        %s1781 = scalar_lea.vmem %s1, 4
        %v1782 = vld [vmem:[%s1781] sm:$0xf]
        %s1783 = scalar_lea.vmem %s2, 8
        %v1784 = vld [vmem:[%s1783] sm:$0xff]
        %1786 = vset.pattern.permute.xlu0 0
        %1787 = vperm.xlu0 %1786, %v1784
        %v1788 = vpop.permute.xlu0 %1787
        %v1791 = vsel %vm987, %v1782, 0
        %v1794 = vsel %vm991, %v1779, 0
        %v1797 = vsel %vm991, %v1780, 0
        %1799 = vmatprep.subr.bf16.mxu0 0
        %1800 = vmatpush1.bf16.msra.mxu0 0
        %1801 = vmatprep.subr.bf16.mxu0 0
        %1802 = vmatpush1.bf16.msra.mxu0 0
        %1803 = vmatprep.subr.bf16.mxu0 0
        %1804 = vmatpush1.bf16.msra.mxu0 0
        %1805 = vmatprep.subr.bf16.mxu0 0
        %1806 = vmatpush1.bf16.msra.mxu0 0
        %1807 = vmatprep.subr.bf16.mxu0 0
        %1808 = vmatpush1.bf16.msra.mxu0 0
        %1809 = vmatprep.subr.bf16.mxu0 0
        %1810 = vmatpush1.bf16.msra.mxu0 0
        %1811 = vmatprep.subr.bf16.mxu0 %v1797
        %1812 = vmatpush1.bf16.msra.mxu0 %v1794
        %1813 = vmatprep.subr.bf16.mxu0 %v1778
        %1814 = vmatpush1.bf16.msra.mxu0 %v1777
        %1815 = vmatprep.subr.bf16.mxu0 0
        %1816 = vmatpush2.bf16.msra.mxu0 0
        %1817 = vmatprep.subr.bf16.mxu0 0
        %1818 = vmatpush2.bf16.msra.mxu0 0
        %1819 = vmatprep.subr.bf16.mxu0 0
        %1820 = vmatpush2.bf16.msra.mxu0 0
        %1821 = vmatprep.subr.bf16.mxu0 0
        %1822 = vmatpush2.bf16.msra.mxu0 0
        %1823 = vmatprep.subr.bf16.mxu0 0
        %1824 = vmatpush2.bf16.msra.mxu0 0
        %1825 = vmatprep.subr.bf16.mxu0 0
        %1826 = vmatpush2.bf16.msra.mxu0 0
        %1827 = vmatprep.subr.bf16.mxu0 0
        %1828 = vmatpush2.bf16.msra.mxu0 0
        %1829 = vmatprep.subr.bf16.mxu0 0
        %1830 = vmatpush2.bf16.msra.mxu0 0
        %1831 = vmatprep.mubr.bf16.mxu0 0
        %1832 = vmatmul.mubr.bf16.gmra.mxu0 %v1791
        %v1833 = vpop.f32.mrf.mxu0
        %v1834 = vadd.f32 %v1788, %v1833
        %v1835 = vpop.f32.mrf.mxu0
        %v1836 = vadd.f32 %v1788, %v1835
        %v1837 = vpop.f32.mrf.mxu0
        %v1838 = vpop.f32.mrf.mxu0
        %1839 = vdwg.mxu0
        %v1840 = vadd.f32 %v1834, %v1039
        %v1841 = vadd.f32 %v1836, %v1040
        %1844 = vrot.lane.b32.xlu0 %v1840, 112
        %v1845 = vpop.permute.xlu0 %1844
        %1846 = vrot.lane.b32.xlu0 %v1841, 112
        %v1847 = vpop.permute.xlu0 %1846
        %vm1848 = vcmask 916480
        %v1849 = vsel %vm1848, %v1845, %v1847
        %1851 = vst [vmem:[%s190] sm:$0xff] %v1849
        %s1852 = sand.u32 %s125, 1
        %s1853 = scalar_lea.sflag [#allocation7], %s1852
        %s1854 = sand.u32 %s125, 1
        %s1855 = smul.addr %s1854, 8
        %s1856 = scalar_lea.vmem [#allocation6], %s1855
        // Predicated region
        $region83: #{_lambda_.1} parent=35 // pred_check
          %p1857 = pneg %p135
        $region84: #{_lambda_.1} parent=35 // pred_check_branch
          %1859 = sbr.rel (%p1857) target = $region86
        $region85: #{_lambda_.1} parent=35 // pred_region
          %s1861 = ssub.s32 128, 128
          %1862 = vsyncadd %s1853, %s1861
          %s1863 = sadd.s32 %s24, %s23
          %s1864 = smul.addr %s1863, 128
          %s1865 = scalar_lea.hbm %s5, %s1864
          %s1867 = sshll.u32 %s1856, 4
          %s1868 = int_to_ptr.vmem [resolvable:$true] %s1867
          %1870 = dma.vmem_to_hbm [thread:$0]  %s1868, 128, %s1865, %s1853
        $region86: #{_lambda_.1} parent=35 // pred_fallthru
          _
      $region36: #{_lambda_.1} parent=5 // pred_fallthru
        _
      %p1871 = scmp.le.s32.totalorder 2, %s14
      // Predicated region
      $region87: #{_lambda_.1} parent=5 // pred_check
        %p1872 = pneg %p1871
      $region88: #{_lambda_.1} parent=5 // pred_check_branch
        %1874 = sbr.rel (%p1872) target = $region90
      $region89: #{_lambda_.1} parent=5 // pred_region
        %s1875 = ssub.s32 %s14, 2
        // Predicated region
        $region91: #{_lambda_.1} parent=89 // pred_check
          %p1876 = pneg %p141
        $region92: #{_lambda_.1} parent=89 // pred_check_branch
          %1878 = sbr.rel (%p1876) target = $region94
        $region93: #{_lambda_.1} parent=89 // pred_region
          %s1879 = sand.u32 %s126, 1
          %s1880 = scalar_lea.sflag [#allocation7], %s1879
          %s1881 = sand.u32 %s126, 1
          %s1882 = smul.addr %s1881, 8
          %s1883 = scalar_lea.vmem [#allocation6], %s1882
          %1884 = dma.done %s1880, 128
        $region94: #{_lambda_.1} parent=89 // pred_fallthru
          _
      $region90: #{_lambda_.1} parent=5 // pred_fallthru
        _
    $region6: #{_lambda_.1} parent=1 // loop_footer
      %s18 = sadd.s32 1, %s14
    $region7: #{_lambda_.1} parent=1 // loop_footer_branch
      %13 = sbr.rel target = $region3
    $region8: #{_lambda_.1} parent=1 // loop_exit
      _
    %1885 = vsyncpa [#allocation7], 1
    %s1886 = scalar_lea.sflag [#allocation7], 1
    %1887 = vsyncpa %s1886, 1
  %1888 = vsyncmov [#allocation5]
  %s1889 = vpop.sfrf %1888
  %p1890 = scmp.eq.s32.totalorder %s1889, 0
  %p1891 = pneg %p1890
  %1893 = shalt.err (%p1891)

</llo_original>
